<compile_context>
chip_gen: v5e
topology: v5e:2x2
jax: 0.10.0
libtpu: 0.0.40
codegen_flags: <defaults>
</compile_context>

<pallas_src>
import functools

import jax
import jax.numpy as jnp
import numpy as np
from jax.experimental import pallas as pl
from jax.experimental.pallas import tpu as pltpu

N_DIM = 6
N_DEPTH = 2          # must be even (asserted by the torch module)
N_SPLIT_AT = 2
N_WIDTH = 32
BATCH = 8            # one sublane tile; actnorm stats are exact (no pad rows)

ALPHA = 0.6
ACTNORM_SCALE = 1.0
LOGSCALE_FACTOR = 3.0

VEC_ROWS = 8         # b, logs, coef, bs, b1, b2, b3, bf   (per depth, f32)
N_WEIGHTS = 5        # ws, w1, w2, w3, wf                  (per depth, bf16 hi/lo)


def compute_splits(n_dim, n_depth, n_split_at):
    sp = []
    sign = -1
    for _ in range(n_depth):
        sign *= -1
        sp.append((n_split_at * sign + n_dim) % n_dim)
    return tuple(sp)


def make_flow_kernel(n_dim, n_depth, n_width):
    def kernel(x_ref, vec_ref, w_ref, out_ref):
        z = x_ref[...].astype(jnp.float32)          # (B, n_width), lane-padded

        mm = functools.partial(jnp.dot, preferred_element_type=jnp.float32)

        def dot_hi_lo(a, w_hi, w_lo):
            # ~f32-accurate matmul: three independent single-pass bf16 MXU matmuls
            # (manual Precision.HIGH; weight hi/lo halves pre-split host-side).
            a_hi = a.astype(jnp.bfloat16)
            a_lo = (a - a_hi.astype(jnp.float32)).astype(jnp.bfloat16)
            return mm(a_hi, w_hi) + mm(a_lo, w_hi) + mm(a_hi, w_lo)

        for i in range(n_depth):                    # n_depth tiny -> static unroll
            vbase = i * VEC_ROWS
            vec = vec_ref[vbase:vbase + VEC_ROWS, :]       # (8, n_width), f32
            b_k = vec[0:1, :]
            logs = vec[1:2, :]
            coef = vec[2:3, :]        # [gamma on z2 cols | ALPHA on scale cols (+dup) | 0]
            bs = vec[3:4, :]
            b1 = vec[4:5, :]
            b2 = vec[5:6, :]
            b3 = vec[6:7, :]
            bf = vec[7:8, :]

            wbase = i * N_WEIGHTS * 2 * n_width

            def w(j, half, _wbase=wbase):
                r = _wbase + (2 * j + half) * n_width
                return w_ref[r:r + n_width, :]             # (n_width, n_width), bf16

            # ---------- actnorm (data-init path of the first forward call) ----------
            mean = jnp.mean(z, axis=0, keepdims=True)
            var = jnp.mean(jnp.square(z - mean), axis=0, keepdims=True)
            logs_init = (jnp.log(ACTNORM_SCALE / (jnp.sqrt(var) + 1e-6))
                         / LOGSCALE_FACTOR)
            s = jnp.clip(logs + logs_init, -5.0, 5.0)
            z = (z + (b_k - mean)) * jnp.exp(s)

            # ---------- affine coupling, full lane-width formulation ----------
            # ws/wf/coef are zero on z1 columns (flip folded host-side), so those columns
            # are exact fixed points of the update below; padding columns (>= n_dim) never
            # feed back into real columns.
            h = jnp.maximum(dot_hi_lo(z, w(0, 0), w(0, 1)) + bs, 0.0)
            h = jnp.maximum(dot_hi_lo(h, w(1, 0), w(1, 1)) + b1, 0.0)
            h = jnp.maximum(dot_hi_lo(h, w(2, 0), w(2, 1)) + b2, 0.0)
            h = jnp.maximum(dot_hi_lo(h, w(3, 0), w(3, 1)) + b3, 0.0)
            # Fused head: cols [0,n_dim) = gamma*tanh(shift_raw) aligned with z,
            #             cols [n_dim,2n_dim) (+ dup at [W-n_dim,W)) = ALPHA*tanh(scale_raw).
            st = coef * jnp.tanh(dot_hi_lo(h, w(4, 0), w(4, 1)) + bf)
            # XLU lane rotation brings the scale block into alignment with z; the host-side
            # duplicate makes this correct for either rotate-direction convention.
            scale = pltpu.roll(st, n_width - n_dim, axis=1)
            z = z + scale * z + st
            # torch.flip is pure bookkeeping (folded into the next depth's params).

        out_ref[...] = z.astype(out_ref.dtype)

    return kernel


def flow_mapping_forward(x, vec_slab, w_slab, n_dim, n_depth, n_width):
    batch = x.shape[0]
    x_pad = jnp.pad(x.astype(jnp.float32), ((0, 0), (0, n_width - n_dim)))
    kernel = make_flow_kernel(n_dim, n_depth, n_width)
    out = pl.pallas_call(
        kernel,
        out_shape=jax.ShapeDtypeStruct((batch, n_width), jnp.float32),
        in_specs=[pl.BlockSpec(memory_space=pltpu.MemorySpace.VMEM),
                  pl.BlockSpec(memory_space=pltpu.MemorySpace.VMEM),
                  pl.BlockSpec(memory_space=pltpu.MemorySpace.VMEM)],
        out_specs=pl.BlockSpec(memory_space=pltpu.MemorySpace.VMEM),
    )(x_pad, vec_slab, w_slab)
    return out[:, :n_dim]


def init_params(key, n_dim, splits, n_width):
    """Torch-semantic parameters: xavier-normal weights (stored (in, out)), zero MLP biases.
    b / logs / log_gamma are zero in the torch init; small non-zero values are used here so
    the test exercises the flip/permutation folding of every parameter."""
    ref_params = []

    def xavier(k, fan_in, fan_out):
        std = (2.0 / (fan_in + fan_out)) ** 0.5
        return std * jax.random.normal(k, (fan_in, fan_out), jnp.float32)

    for i, n_split in enumerate(splits):
        n_out = (n_dim - n_split) * 2
        keys = jax.random.split(jax.random.fold_in(key, i), 8)
        ref_params.append(dict(
            Ws=xavier(keys[0], n_split, n_width), bs=jnp.zeros((1, n_width), jnp.float32),
            W1=xavier(keys[1], n_width, n_width), b1=jnp.zeros((1, n_width), jnp.float32),
            W2=xavier(keys[2], n_width, n_width), b2=jnp.zeros((1, n_width), jnp.float32),
            W3=xavier(keys[3], n_width, n_width), b3=jnp.zeros((1, n_width), jnp.float32),
            Wf=xavier(keys[4], n_width, n_out), bf=jnp.zeros((1, n_out), jnp.float32),
            b=0.1 * jax.random.normal(keys[5], (1, n_dim), jnp.float32),
            logs=0.1 * jax.random.normal(keys[6], (1, n_dim), jnp.float32),
            log_gamma=0.1 * jax.random.normal(keys[7], (1, n_dim - n_split), jnp.float32),
        ))
    return ref_params


def pack_params(ref_params, splits, n_dim, n_width):
    """Fold torch.flip, the strided 0::2/1::2 head split, exp(clip(log_gamma)) and the ALPHA
    factor into the parameters; zero-pad everything to the lane-padded n_width layout; and
    pre-split the weights into bf16 hi/lo halves.

    Returns:
      vec_slab: f32  (n_depth * 8, n_width)                biases / coef rows
      w_slab:   bf16 (n_depth * 5 * 2 * n_width, n_width)  per weight: [hi rows | lo rows]
    """
    n_depth = len(splits)
    assert 3 * n_dim <= n_width, "scale-dup layout needs 3*n_dim <= n_width"
    vec_slab = np.zeros((n_depth * VEC_ROWS, n_width), np.float32)
    w_f32 = np.zeros((n_depth * N_WEIGHTS, n_width, n_width), np.float32)

    perm = list(range(n_dim))          # invariant: z_torch[:, c] == z_kernel[:, perm[c]]
    for i, p in enumerate(ref_params):
        n_split = splits[i]
        n_rest = n_dim - n_split
        q = {k: np.asarray(v, np.float32) for k, v in p.items()}

        vec = np.zeros((VEC_ROWS, n_width), np.float32)
        for c in range(n_dim):
            vec[0, perm[c]] = q['b'][0, c]
            vec[1, perm[c]] = q['logs'][0, c]
        gamma = np.exp(np.clip(q['log_gamma'][0], -5.0, 5.0))

        wf_shift, bf_shift = q['Wf'][:, 0::2], q['bf'][0, 0::2]
        wf_scale, bf_scale = q['Wf'][:, 1::2], q['bf'][0, 1::2]
        wf_full = np.zeros((n_width, n_width), np.float32)
        for m in range(n_rest):
            c = perm[n_split + m]                       # kernel column of this z2 coord
            # shift head, aligned with z's columns
            wf_full[:, c] = wf_shift[:, m]
            vec[7, c] = bf_shift[m]
            vec[2, c] = gamma[m]
            # scale head at c+n_dim, duplicated at c+(n_width-n_dim) so the in-kernel lane
            # rotation by (n_width - n_dim) is correct under either rotate direction.
            for off in (n_dim, n_width - n_dim):
                wf_full[:, c + off] = wf_scale[:, m]
                vec[7, c + off] = bf_scale[m]
                vec[2, c + off] = ALPHA
        vec[3, :] = q['bs'][0]
        vec[4, :] = q['b1'][0]
        vec[5, :] = q['b2'][0]
        vec[6, :] = q['b3'][0]

        ws_full = np.zeros((n_width, n_width), np.float32)   # z1-column rows only
        for j in range(n_split):
            ws_full[perm[j], :] = q['Ws'][j, :]

        vec_slab[i * VEC_ROWS:(i + 1) * VEC_ROWS, :] = vec
        w_f32[i * N_WEIGHTS + 0] = ws_full
        w_f32[i * N_WEIGHTS + 1] = q['W1']
        w_f32[i * N_WEIGHTS + 2] = q['W2']
        w_f32[i * N_WEIGHTS + 3] = q['W3']
        w_f32[i * N_WEIGHTS + 4] = wf_full

        # torch.flip(z, [1]) after this depth -> update the column permutation only.
        perm = [perm[n_dim - 1 - c] for c in range(n_dim)]

    assert perm == list(range(n_dim)), "n_depth must be even"

    # Host-side bf16 hi/lo split of the weights (kernel never splits its RHS operands).
    w_f32 = jnp.asarray(w_f32)
    w_hi = w_f32.astype(jnp.bfloat16)
    w_lo = (w_f32 - w_hi.astype(jnp.float32)).astype(jnp.bfloat16)
    w_slab = jnp.stack([w_hi, w_lo], axis=1)                 # (D*5, 2, W, W)
    w_slab = w_slab.reshape(len(splits) * N_WEIGHTS * 2 * n_width, n_width)
    return jnp.asarray(vec_slab), w_slab


def flow_mapping_ref(x, ref_params, splits):
    """Pure-JAX reference mirroring the PyTorch forward (first call), f32-accurate."""
    dot = functools.partial(jnp.dot, precision=jax.lax.Precision.HIGHEST)
    z = x
    for i, p in enumerate(ref_params):
        mean = jnp.mean(z, axis=0, keepdims=True)
        var = jnp.mean(jnp.square(z - mean), axis=0, keepdims=True)
        logs_init = jnp.log(ACTNORM_SCALE / (jnp.sqrt(var) + 1e-6)) / LOGSCALE_FACTOR
        s = jnp.clip(p['logs'] + logs_init, -5.0, 5.0)
        z = (z + (p['b'] - mean)) * jnp.exp(s)

        n_split = splits[i]
        z1, z2 = z[:, :n_split], z[:, n_split:]
        h = jax.nn.relu(dot(z1, p['Ws']) + p['bs'])
        h = jax.nn.relu(dot(h, p['W1']) + p['b1'])
        h = jax.nn.relu(dot(h, p['W2']) + p['b2'])
        h = jax.nn.relu(dot(h, p['W3']) + p['b3'])
        h = dot(h, p['Wf']) + p['bf']
        shift = h[:, 0::2]
        scale = ALPHA * jnp.tanh(h[:, 1::2])
        shift = jnp.exp(jnp.clip(p['log_gamma'], -5.0, 5.0)) * jnp.tanh(shift)
        z2 = z2 + scale * z2 + shift
        z = jnp.concatenate([z1, z2], axis=1)
        z = z[:, ::-1]
    return z


if __name__ == "__main__":
    splits = compute_splits(N_DIM, N_DEPTH, N_SPLIT_AT)

    key = jax.random.PRNGKey(0)
    kx, kp = jax.random.split(key)
    x = jax.random.normal(kx, (BATCH, N_DIM), jnp.float32)
    ref_params = init_params(kp, N_DIM, splits, N_WIDTH)
    vec_slab, w_slab = pack_params(ref_params, splits, N_DIM, N_WIDTH)

    out = flow_mapping_forward(x, vec_slab, w_slab, N_DIM, N_DEPTH, N_WIDTH)
    out = jax.block_until_ready(out)

    ref = flow_mapping_ref(x, ref_params, splits)
    max_err = float(jnp.max(jnp.abs(out - ref)))
    assert out.shape == (BATCH, N_DIM)
    assert jnp.allclose(out, ref, atol=1e-3, rtol=1e-3), (max_err, out, ref)
    print("KERNEL_OK")
</pallas_src>

<mosaic_0001>
module attributes {stable_mosaic.version = 11 : i64} {
  func.func @kernel(%arg0: memref<8x32xf32, #tpu.memory_space<vmem>>, %arg1: memref<16x32xf32, #tpu.memory_space<vmem>>, %arg2: memref<640x32xbf16, #tpu.memory_space<vmem>>, %arg3: memref<8x32xf32, #tpu.memory_space<vmem>>) attributes {dimension_semantics = [], scalar_prefetch = 0 : i64, scratch_operands = 0 : i64, tpu.core_type = #tpu.core_type<tc>} {
    %c0 = arith.constant 0 : index
    %c0_0 = arith.constant 0 : index
    %0 = vector.load %arg0[%c0, %c0_0] : memref<8x32xf32, #tpu.memory_space<vmem>>, vector<8x32xf32>
    %c0_1 = arith.constant 0 : index
    %c0_2 = arith.constant 0 : index
    %1 = vector.load %arg1[%c0_1, %c0_2] : memref<16x32xf32, #tpu.memory_space<vmem>>, vector<8x32xf32>
    %2 = vector.extract_strided_slice %1 {offsets = [0, 0], sizes = [1, 32], strides = [1, 1]} : vector<8x32xf32> to vector<1x32xf32>
    %3 = vector.extract_strided_slice %1 {offsets = [1, 0], sizes = [1, 32], strides = [1, 1]} : vector<8x32xf32> to vector<1x32xf32>
    %4 = vector.extract_strided_slice %1 {offsets = [2, 0], sizes = [1, 32], strides = [1, 1]} : vector<8x32xf32> to vector<1x32xf32>
    %5 = vector.extract_strided_slice %1 {offsets = [3, 0], sizes = [1, 32], strides = [1, 1]} : vector<8x32xf32> to vector<1x32xf32>
    %6 = vector.extract_strided_slice %1 {offsets = [4, 0], sizes = [1, 32], strides = [1, 1]} : vector<8x32xf32> to vector<1x32xf32>
    %7 = vector.extract_strided_slice %1 {offsets = [5, 0], sizes = [1, 32], strides = [1, 1]} : vector<8x32xf32> to vector<1x32xf32>
    %8 = vector.extract_strided_slice %1 {offsets = [6, 0], sizes = [1, 32], strides = [1, 1]} : vector<8x32xf32> to vector<1x32xf32>
    %9 = vector.extract_strided_slice %1 {offsets = [7, 0], sizes = [1, 32], strides = [1, 1]} : vector<8x32xf32> to vector<1x32xf32>
    %cst = arith.constant dense<0.000000e+00> : vector<32xf32>
    %10 = vector.multi_reduction <add>, %0, %cst [0] : vector<8x32xf32> to vector<32xf32>
    %11 = vector.shape_cast %10 : vector<32xf32> to vector<1x32xf32>
    %cst_3 = arith.constant 8.000000e+00 : f32
    %12 = vector.broadcast %cst_3 : f32 to vector<1x32xf32>
    %13 = arith.divf %11, %12 : vector<1x32xf32>
    %14 = vector.broadcast %13 : vector<1x32xf32> to vector<8x32xf32>
    %15 = arith.subf %0, %14 : vector<8x32xf32>
    %16 = arith.mulf %15, %15 : vector<8x32xf32>
    %cst_4 = arith.constant dense<0.000000e+00> : vector<32xf32>
    %17 = vector.multi_reduction <add>, %16, %cst_4 [0] : vector<8x32xf32> to vector<32xf32>
    %18 = vector.shape_cast %17 : vector<32xf32> to vector<1x32xf32>
    %cst_5 = arith.constant 8.000000e+00 : f32
    %19 = vector.broadcast %cst_5 : f32 to vector<1x32xf32>
    %20 = arith.divf %18, %19 : vector<1x32xf32>
    %21 = math.sqrt %20 : vector<1x32xf32>
    %cst_6 = arith.constant 9.99999997E-7 : f32
    %22 = vector.broadcast %cst_6 : f32 to vector<1x32xf32>
    %23 = arith.addf %21, %22 : vector<1x32xf32>
    %cst_7 = arith.constant 1.000000e+00 : f32
    %24 = vector.broadcast %cst_7 : f32 to vector<1x32xf32>
    %25 = arith.divf %24, %23 : vector<1x32xf32>
    %26 = math.log %25 : vector<1x32xf32>
    %cst_8 = arith.constant 3.000000e+00 : f32
    %27 = vector.broadcast %cst_8 : f32 to vector<1x32xf32>
    %28 = arith.divf %26, %27 : vector<1x32xf32>
    %29 = arith.addf %3, %28 : vector<1x32xf32>
    %cst_9 = arith.constant -5.000000e+00 : f32
    %cst_10 = arith.constant 5.000000e+00 : f32
    %30 = vector.broadcast %cst_9 : f32 to vector<1x32xf32>
    %31 = arith.maximumf %30, %29 : vector<1x32xf32>
    %32 = vector.broadcast %cst_10 : f32 to vector<1x32xf32>
    %33 = arith.minimumf %32, %31 : vector<1x32xf32>
    %34 = arith.subf %2, %13 : vector<1x32xf32>
    %35 = vector.broadcast %34 : vector<1x32xf32> to vector<8x32xf32>
    %36 = arith.addf %0, %35 : vector<8x32xf32>
    %37 = math.exp %33 : vector<1x32xf32>
    %38 = vector.broadcast %37 : vector<1x32xf32> to vector<8x32xf32>
    %39 = arith.mulf %36, %38 : vector<8x32xf32>
    %c0_11 = arith.constant 0 : index
    %c0_12 = arith.constant 0 : index
    %40 = vector.load %arg2[%c0_11, %c0_12] : memref<640x32xbf16, #tpu.memory_space<vmem>>, vector<32x32xbf16>
    %c32 = arith.constant 32 : index
    %c0_13 = arith.constant 0 : index
    %41 = vector.load %arg2[%c32, %c0_13] : memref<640x32xbf16, #tpu.memory_space<vmem>>, vector<32x32xbf16>
    %42 = arith.truncf %39 : vector<8x32xf32> to vector<8x32xbf16>
    %43 = arith.extf %42 : vector<8x32xbf16> to vector<8x32xf32>
    %44 = arith.subf %39, %43 : vector<8x32xf32>
    %45 = arith.truncf %44 : vector<8x32xf32> to vector<8x32xbf16>
    %cst_14 = arith.constant dense<0.000000e+00> : vector<8x32xf32>
    %46 = tpu.matmul %42, %40, %cst_14 {dimension_numbers = #tpu.dot_dimension_numbers<[1], [0], [0], [1], [0, 0, 1, 1], [], []>} : vector<8x32xbf16>, vector<32x32xbf16>, vector<8x32xf32> -> vector<8x32xf32>
    %cst_15 = arith.constant dense<0.000000e+00> : vector<8x32xf32>
    %47 = tpu.matmul %45, %40, %cst_15 {dimension_numbers = #tpu.dot_dimension_numbers<[1], [0], [0], [1], [0, 0, 1, 1], [], []>} : vector<8x32xbf16>, vector<32x32xbf16>, vector<8x32xf32> -> vector<8x32xf32>
    %48 = arith.addf %46, %47 : vector<8x32xf32>
    %cst_16 = arith.constant dense<0.000000e+00> : vector<8x32xf32>
    %49 = tpu.matmul %42, %41, %cst_16 {dimension_numbers = #tpu.dot_dimension_numbers<[1], [0], [0], [1], [0, 0, 1, 1], [], []>} : vector<8x32xbf16>, vector<32x32xbf16>, vector<8x32xf32> -> vector<8x32xf32>
    %50 = arith.addf %48, %49 : vector<8x32xf32>
    %51 = vector.broadcast %5 : vector<1x32xf32> to vector<8x32xf32>
    %52 = arith.addf %50, %51 : vector<8x32xf32>
    %cst_17 = arith.constant 0.000000e+00 : f32
    %53 = vector.broadcast %cst_17 : f32 to vector<8x32xf32>
    %54 = arith.maximumf %52, %53 : vector<8x32xf32>
    %c64 = arith.constant 64 : index
    %c0_18 = arith.constant 0 : index
    %55 = vector.load %arg2[%c64, %c0_18] : memref<640x32xbf16, #tpu.memory_space<vmem>>, vector<32x32xbf16>
    %c96 = arith.constant 96 : index
    %c0_19 = arith.constant 0 : index
    %56 = vector.load %arg2[%c96, %c0_19] : memref<640x32xbf16, #tpu.memory_space<vmem>>, vector<32x32xbf16>
    %57 = arith.truncf %54 : vector<8x32xf32> to vector<8x32xbf16>
    %58 = arith.extf %57 : vector<8x32xbf16> to vector<8x32xf32>
    %59 = arith.subf %54, %58 : vector<8x32xf32>
    %60 = arith.truncf %59 : vector<8x32xf32> to vector<8x32xbf16>
    %cst_20 = arith.constant dense<0.000000e+00> : vector<8x32xf32>
    %61 = tpu.matmul %57, %55, %cst_20 {dimension_numbers = #tpu.dot_dimension_numbers<[1], [0], [0], [1], [0, 0, 1, 1], [], []>} : vector<8x32xbf16>, vector<32x32xbf16>, vector<8x32xf32> -> vector<8x32xf32>
    %cst_21 = arith.constant dense<0.000000e+00> : vector<8x32xf32>
    %62 = tpu.matmul %60, %55, %cst_21 {dimension_numbers = #tpu.dot_dimension_numbers<[1], [0], [0], [1], [0, 0, 1, 1], [], []>} : vector<8x32xbf16>, vector<32x32xbf16>, vector<8x32xf32> -> vector<8x32xf32>
    %63 = arith.addf %61, %62 : vector<8x32xf32>
    %cst_22 = arith.constant dense<0.000000e+00> : vector<8x32xf32>
    %64 = tpu.matmul %57, %56, %cst_22 {dimension_numbers = #tpu.dot_dimension_numbers<[1], [0], [0], [1], [0, 0, 1, 1], [], []>} : vector<8x32xbf16>, vector<32x32xbf16>, vector<8x32xf32> -> vector<8x32xf32>
    %65 = arith.addf %63, %64 : vector<8x32xf32>
    %66 = vector.broadcast %6 : vector<1x32xf32> to vector<8x32xf32>
    %67 = arith.addf %65, %66 : vector<8x32xf32>
    %cst_23 = arith.constant 0.000000e+00 : f32
    %68 = vector.broadcast %cst_23 : f32 to vector<8x32xf32>
    %69 = arith.maximumf %67, %68 : vector<8x32xf32>
    %c128 = arith.constant 128 : index
    %c0_24 = arith.constant 0 : index
    %70 = vector.load %arg2[%c128, %c0_24] : memref<640x32xbf16, #tpu.memory_space<vmem>>, vector<32x32xbf16>
    %c160 = arith.constant 160 : index
    %c0_25 = arith.constant 0 : index
    %71 = vector.load %arg2[%c160, %c0_25] : memref<640x32xbf16, #tpu.memory_space<vmem>>, vector<32x32xbf16>
    %72 = arith.truncf %69 : vector<8x32xf32> to vector<8x32xbf16>
    %73 = arith.extf %72 : vector<8x32xbf16> to vector<8x32xf32>
    %74 = arith.subf %69, %73 : vector<8x32xf32>
    %75 = arith.truncf %74 : vector<8x32xf32> to vector<8x32xbf16>
    %cst_26 = arith.constant dense<0.000000e+00> : vector<8x32xf32>
    %76 = tpu.matmul %72, %70, %cst_26 {dimension_numbers = #tpu.dot_dimension_numbers<[1], [0], [0], [1], [0, 0, 1, 1], [], []>} : vector<8x32xbf16>, vector<32x32xbf16>, vector<8x32xf32> -> vector<8x32xf32>
    %cst_27 = arith.constant dense<0.000000e+00> : vector<8x32xf32>
    %77 = tpu.matmul %75, %70, %cst_27 {dimension_numbers = #tpu.dot_dimension_numbers<[1], [0], [0], [1], [0, 0, 1, 1], [], []>} : vector<8x32xbf16>, vector<32x32xbf16>, vector<8x32xf32> -> vector<8x32xf32>
    %78 = arith.addf %76, %77 : vector<8x32xf32>
    %cst_28 = arith.constant dense<0.000000e+00> : vector<8x32xf32>
    %79 = tpu.matmul %72, %71, %cst_28 {dimension_numbers = #tpu.dot_dimension_numbers<[1], [0], [0], [1], [0, 0, 1, 1], [], []>} : vector<8x32xbf16>, vector<32x32xbf16>, vector<8x32xf32> -> vector<8x32xf32>
    %80 = arith.addf %78, %79 : vector<8x32xf32>
    %81 = vector.broadcast %7 : vector<1x32xf32> to vector<8x32xf32>
    %82 = arith.addf %80, %81 : vector<8x32xf32>
    %cst_29 = arith.constant 0.000000e+00 : f32
    %83 = vector.broadcast %cst_29 : f32 to vector<8x32xf32>
    %84 = arith.maximumf %82, %83 : vector<8x32xf32>
    %c192 = arith.constant 192 : index
    %c0_30 = arith.constant 0 : index
    %85 = vector.load %arg2[%c192, %c0_30] : memref<640x32xbf16, #tpu.memory_space<vmem>>, vector<32x32xbf16>
    %c224 = arith.constant 224 : index
    %c0_31 = arith.constant 0 : index
    %86 = vector.load %arg2[%c224, %c0_31] : memref<640x32xbf16, #tpu.memory_space<vmem>>, vector<32x32xbf16>
    %87 = arith.truncf %84 : vector<8x32xf32> to vector<8x32xbf16>
    %88 = arith.extf %87 : vector<8x32xbf16> to vector<8x32xf32>
    %89 = arith.subf %84, %88 : vector<8x32xf32>
    %90 = arith.truncf %89 : vector<8x32xf32> to vector<8x32xbf16>
    %cst_32 = arith.constant dense<0.000000e+00> : vector<8x32xf32>
    %91 = tpu.matmul %87, %85, %cst_32 {dimension_numbers = #tpu.dot_dimension_numbers<[1], [0], [0], [1], [0, 0, 1, 1], [], []>} : vector<8x32xbf16>, vector<32x32xbf16>, vector<8x32xf32> -> vector<8x32xf32>
    %cst_33 = arith.constant dense<0.000000e+00> : vector<8x32xf32>
    %92 = tpu.matmul %90, %85, %cst_33 {dimension_numbers = #tpu.dot_dimension_numbers<[1], [0], [0], [1], [0, 0, 1, 1], [], []>} : vector<8x32xbf16>, vector<32x32xbf16>, vector<8x32xf32> -> vector<8x32xf32>
    %93 = arith.addf %91, %92 : vector<8x32xf32>
    %cst_34 = arith.constant dense<0.000000e+00> : vector<8x32xf32>
    %94 = tpu.matmul %87, %86, %cst_34 {dimension_numbers = #tpu.dot_dimension_numbers<[1], [0], [0], [1], [0, 0, 1, 1], [], []>} : vector<8x32xbf16>, vector<32x32xbf16>, vector<8x32xf32> -> vector<8x32xf32>
    %95 = arith.addf %93, %94 : vector<8x32xf32>
    %96 = vector.broadcast %8 : vector<1x32xf32> to vector<8x32xf32>
    %97 = arith.addf %95, %96 : vector<8x32xf32>
    %cst_35 = arith.constant 0.000000e+00 : f32
    %98 = vector.broadcast %cst_35 : f32 to vector<8x32xf32>
    %99 = arith.maximumf %97, %98 : vector<8x32xf32>
    %c256 = arith.constant 256 : index
    %c0_36 = arith.constant 0 : index
    %100 = vector.load %arg2[%c256, %c0_36] : memref<640x32xbf16, #tpu.memory_space<vmem>>, vector<32x32xbf16>
    %c288 = arith.constant 288 : index
    %c0_37 = arith.constant 0 : index
    %101 = vector.load %arg2[%c288, %c0_37] : memref<640x32xbf16, #tpu.memory_space<vmem>>, vector<32x32xbf16>
    %102 = arith.truncf %99 : vector<8x32xf32> to vector<8x32xbf16>
    %103 = arith.extf %102 : vector<8x32xbf16> to vector<8x32xf32>
    %104 = arith.subf %99, %103 : vector<8x32xf32>
    %105 = arith.truncf %104 : vector<8x32xf32> to vector<8x32xbf16>
    %cst_38 = arith.constant dense<0.000000e+00> : vector<8x32xf32>
    %106 = tpu.matmul %102, %100, %cst_38 {dimension_numbers = #tpu.dot_dimension_numbers<[1], [0], [0], [1], [0, 0, 1, 1], [], []>} : vector<8x32xbf16>, vector<32x32xbf16>, vector<8x32xf32> -> vector<8x32xf32>
    %cst_39 = arith.constant dense<0.000000e+00> : vector<8x32xf32>
    %107 = tpu.matmul %105, %100, %cst_39 {dimension_numbers = #tpu.dot_dimension_numbers<[1], [0], [0], [1], [0, 0, 1, 1], [], []>} : vector<8x32xbf16>, vector<32x32xbf16>, vector<8x32xf32> -> vector<8x32xf32>
    %108 = arith.addf %106, %107 : vector<8x32xf32>
    %cst_40 = arith.constant dense<0.000000e+00> : vector<8x32xf32>
    %109 = tpu.matmul %102, %101, %cst_40 {dimension_numbers = #tpu.dot_dimension_numbers<[1], [0], [0], [1], [0, 0, 1, 1], [], []>} : vector<8x32xbf16>, vector<32x32xbf16>, vector<8x32xf32> -> vector<8x32xf32>
    %110 = arith.addf %108, %109 : vector<8x32xf32>
    %111 = vector.broadcast %9 : vector<1x32xf32> to vector<8x32xf32>
    %112 = arith.addf %110, %111 : vector<8x32xf32>
    %113 = math.tanh %112 : vector<8x32xf32>
    %114 = vector.broadcast %4 : vector<1x32xf32> to vector<8x32xf32>
    %115 = arith.mulf %114, %113 : vector<8x32xf32>
    %c26_i32 = arith.constant 26 : i32
    %116 = tpu.dynamic_rotate %115 by %c26_i32 dim 1 : vector<8x32xf32>, i32 -> vector<8x32xf32>
    %117 = arith.mulf %116, %39 : vector<8x32xf32>
    %118 = arith.addf %39, %117 : vector<8x32xf32>
    %119 = arith.addf %118, %115 : vector<8x32xf32>
    %c8 = arith.constant 8 : index
    %c0_41 = arith.constant 0 : index
    %120 = vector.load %arg1[%c8, %c0_41] : memref<16x32xf32, #tpu.memory_space<vmem>>, vector<8x32xf32>
    %121 = vector.extract_strided_slice %120 {offsets = [0, 0], sizes = [1, 32], strides = [1, 1]} : vector<8x32xf32> to vector<1x32xf32>
    %122 = vector.extract_strided_slice %120 {offsets = [1, 0], sizes = [1, 32], strides = [1, 1]} : vector<8x32xf32> to vector<1x32xf32>
    %123 = vector.extract_strided_slice %120 {offsets = [2, 0], sizes = [1, 32], strides = [1, 1]} : vector<8x32xf32> to vector<1x32xf32>
    %124 = vector.extract_strided_slice %120 {offsets = [3, 0], sizes = [1, 32], strides = [1, 1]} : vector<8x32xf32> to vector<1x32xf32>
    %125 = vector.extract_strided_slice %120 {offsets = [4, 0], sizes = [1, 32], strides = [1, 1]} : vector<8x32xf32> to vector<1x32xf32>
    %126 = vector.extract_strided_slice %120 {offsets = [5, 0], sizes = [1, 32], strides = [1, 1]} : vector<8x32xf32> to vector<1x32xf32>
    %127 = vector.extract_strided_slice %120 {offsets = [6, 0], sizes = [1, 32], strides = [1, 1]} : vector<8x32xf32> to vector<1x32xf32>
    %128 = vector.extract_strided_slice %120 {offsets = [7, 0], sizes = [1, 32], strides = [1, 1]} : vector<8x32xf32> to vector<1x32xf32>
    %cst_42 = arith.constant dense<0.000000e+00> : vector<32xf32>
    %129 = vector.multi_reduction <add>, %119, %cst_42 [0] : vector<8x32xf32> to vector<32xf32>
    %130 = vector.shape_cast %129 : vector<32xf32> to vector<1x32xf32>
    %cst_43 = arith.constant 8.000000e+00 : f32
    %131 = vector.broadcast %cst_43 : f32 to vector<1x32xf32>
    %132 = arith.divf %130, %131 : vector<1x32xf32>
    %133 = vector.broadcast %132 : vector<1x32xf32> to vector<8x32xf32>
    %134 = arith.subf %119, %133 : vector<8x32xf32>
    %135 = arith.mulf %134, %134 : vector<8x32xf32>
    %cst_44 = arith.constant dense<0.000000e+00> : vector<32xf32>
    %136 = vector.multi_reduction <add>, %135, %cst_44 [0] : vector<8x32xf32> to vector<32xf32>
    %137 = vector.shape_cast %136 : vector<32xf32> to vector<1x32xf32>
    %cst_45 = arith.constant 8.000000e+00 : f32
    %138 = vector.broadcast %cst_45 : f32 to vector<1x32xf32>
    %139 = arith.divf %137, %138 : vector<1x32xf32>
    %140 = math.sqrt %139 : vector<1x32xf32>
    %cst_46 = arith.constant 9.99999997E-7 : f32
    %141 = vector.broadcast %cst_46 : f32 to vector<1x32xf32>
    %142 = arith.addf %140, %141 : vector<1x32xf32>
    %cst_47 = arith.constant 1.000000e+00 : f32
    %143 = vector.broadcast %cst_47 : f32 to vector<1x32xf32>
    %144 = arith.divf %143, %142 : vector<1x32xf32>
    %145 = math.log %144 : vector<1x32xf32>
    %cst_48 = arith.constant 3.000000e+00 : f32
    %146 = vector.broadcast %cst_48 : f32 to vector<1x32xf32>
    %147 = arith.divf %145, %146 : vector<1x32xf32>
    %148 = arith.addf %122, %147 : vector<1x32xf32>
    %cst_49 = arith.constant -5.000000e+00 : f32
    %cst_50 = arith.constant 5.000000e+00 : f32
    %149 = vector.broadcast %cst_49 : f32 to vector<1x32xf32>
    %150 = arith.maximumf %149, %148 : vector<1x32xf32>
    %151 = vector.broadcast %cst_50 : f32 to vector<1x32xf32>
    %152 = arith.minimumf %151, %150 : vector<1x32xf32>
    %153 = arith.subf %121, %132 : vector<1x32xf32>
    %154 = vector.broadcast %153 : vector<1x32xf32> to vector<8x32xf32>
    %155 = arith.addf %119, %154 : vector<8x32xf32>
    %156 = math.exp %152 : vector<1x32xf32>
    %157 = vector.broadcast %156 : vector<1x32xf32> to vector<8x32xf32>
    %158 = arith.mulf %155, %157 : vector<8x32xf32>
    %c320 = arith.constant 320 : index
    %c0_51 = arith.constant 0 : index
    %159 = vector.load %arg2[%c320, %c0_51] : memref<640x32xbf16, #tpu.memory_space<vmem>>, vector<32x32xbf16>
    %c352 = arith.constant 352 : index
    %c0_52 = arith.constant 0 : index
    %160 = vector.load %arg2[%c352, %c0_52] : memref<640x32xbf16, #tpu.memory_space<vmem>>, vector<32x32xbf16>
    %161 = arith.truncf %158 : vector<8x32xf32> to vector<8x32xbf16>
    %162 = arith.extf %161 : vector<8x32xbf16> to vector<8x32xf32>
    %163 = arith.subf %158, %162 : vector<8x32xf32>
    %164 = arith.truncf %163 : vector<8x32xf32> to vector<8x32xbf16>
    %cst_53 = arith.constant dense<0.000000e+00> : vector<8x32xf32>
    %165 = tpu.matmul %161, %159, %cst_53 {dimension_numbers = #tpu.dot_dimension_numbers<[1], [0], [0], [1], [0, 0, 1, 1], [], []>} : vector<8x32xbf16>, vector<32x32xbf16>, vector<8x32xf32> -> vector<8x32xf32>
    %cst_54 = arith.constant dense<0.000000e+00> : vector<8x32xf32>
    %166 = tpu.matmul %164, %159, %cst_54 {dimension_numbers = #tpu.dot_dimension_numbers<[1], [0], [0], [1], [0, 0, 1, 1], [], []>} : vector<8x32xbf16>, vector<32x32xbf16>, vector<8x32xf32> -> vector<8x32xf32>
    %167 = arith.addf %165, %166 : vector<8x32xf32>
    %cst_55 = arith.constant dense<0.000000e+00> : vector<8x32xf32>
    %168 = tpu.matmul %161, %160, %cst_55 {dimension_numbers = #tpu.dot_dimension_numbers<[1], [0], [0], [1], [0, 0, 1, 1], [], []>} : vector<8x32xbf16>, vector<32x32xbf16>, vector<8x32xf32> -> vector<8x32xf32>
    %169 = arith.addf %167, %168 : vector<8x32xf32>
    %170 = vector.broadcast %124 : vector<1x32xf32> to vector<8x32xf32>
    %171 = arith.addf %169, %170 : vector<8x32xf32>
    %cst_56 = arith.constant 0.000000e+00 : f32
    %172 = vector.broadcast %cst_56 : f32 to vector<8x32xf32>
    %173 = arith.maximumf %171, %172 : vector<8x32xf32>
    %c384 = arith.constant 384 : index
    %c0_57 = arith.constant 0 : index
    %174 = vector.load %arg2[%c384, %c0_57] : memref<640x32xbf16, #tpu.memory_space<vmem>>, vector<32x32xbf16>
    %c416 = arith.constant 416 : index
    %c0_58 = arith.constant 0 : index
    %175 = vector.load %arg2[%c416, %c0_58] : memref<640x32xbf16, #tpu.memory_space<vmem>>, vector<32x32xbf16>
    %176 = arith.truncf %173 : vector<8x32xf32> to vector<8x32xbf16>
    %177 = arith.extf %176 : vector<8x32xbf16> to vector<8x32xf32>
    %178 = arith.subf %173, %177 : vector<8x32xf32>
    %179 = arith.truncf %178 : vector<8x32xf32> to vector<8x32xbf16>
    %cst_59 = arith.constant dense<0.000000e+00> : vector<8x32xf32>
    %180 = tpu.matmul %176, %174, %cst_59 {dimension_numbers = #tpu.dot_dimension_numbers<[1], [0], [0], [1], [0, 0, 1, 1], [], []>} : vector<8x32xbf16>, vector<32x32xbf16>, vector<8x32xf32> -> vector<8x32xf32>
    %cst_60 = arith.constant dense<0.000000e+00> : vector<8x32xf32>
    %181 = tpu.matmul %179, %174, %cst_60 {dimension_numbers = #tpu.dot_dimension_numbers<[1], [0], [0], [1], [0, 0, 1, 1], [], []>} : vector<8x32xbf16>, vector<32x32xbf16>, vector<8x32xf32> -> vector<8x32xf32>
    %182 = arith.addf %180, %181 : vector<8x32xf32>
    %cst_61 = arith.constant dense<0.000000e+00> : vector<8x32xf32>
    %183 = tpu.matmul %176, %175, %cst_61 {dimension_numbers = #tpu.dot_dimension_numbers<[1], [0], [0], [1], [0, 0, 1, 1], [], []>} : vector<8x32xbf16>, vector<32x32xbf16>, vector<8x32xf32> -> vector<8x32xf32>
    %184 = arith.addf %182, %183 : vector<8x32xf32>
    %185 = vector.broadcast %125 : vector<1x32xf32> to vector<8x32xf32>
    %186 = arith.addf %184, %185 : vector<8x32xf32>
    %cst_62 = arith.constant 0.000000e+00 : f32
    %187 = vector.broadcast %cst_62 : f32 to vector<8x32xf32>
    %188 = arith.maximumf %186, %187 : vector<8x32xf32>
    %c448 = arith.constant 448 : index
    %c0_63 = arith.constant 0 : index
    %189 = vector.load %arg2[%c448, %c0_63] : memref<640x32xbf16, #tpu.memory_space<vmem>>, vector<32x32xbf16>
    %c480 = arith.constant 480 : index
    %c0_64 = arith.constant 0 : index
    %190 = vector.load %arg2[%c480, %c0_64] : memref<640x32xbf16, #tpu.memory_space<vmem>>, vector<32x32xbf16>
    %191 = arith.truncf %188 : vector<8x32xf32> to vector<8x32xbf16>
    %192 = arith.extf %191 : vector<8x32xbf16> to vector<8x32xf32>
    %193 = arith.subf %188, %192 : vector<8x32xf32>
    %194 = arith.truncf %193 : vector<8x32xf32> to vector<8x32xbf16>
    %cst_65 = arith.constant dense<0.000000e+00> : vector<8x32xf32>
    %195 = tpu.matmul %191, %189, %cst_65 {dimension_numbers = #tpu.dot_dimension_numbers<[1], [0], [0], [1], [0, 0, 1, 1], [], []>} : vector<8x32xbf16>, vector<32x32xbf16>, vector<8x32xf32> -> vector<8x32xf32>
    %cst_66 = arith.constant dense<0.000000e+00> : vector<8x32xf32>
    %196 = tpu.matmul %194, %189, %cst_66 {dimension_numbers = #tpu.dot_dimension_numbers<[1], [0], [0], [1], [0, 0, 1, 1], [], []>} : vector<8x32xbf16>, vector<32x32xbf16>, vector<8x32xf32> -> vector<8x32xf32>
    %197 = arith.addf %195, %196 : vector<8x32xf32>
    %cst_67 = arith.constant dense<0.000000e+00> : vector<8x32xf32>
    %198 = tpu.matmul %191, %190, %cst_67 {dimension_numbers = #tpu.dot_dimension_numbers<[1], [0], [0], [1], [0, 0, 1, 1], [], []>} : vector<8x32xbf16>, vector<32x32xbf16>, vector<8x32xf32> -> vector<8x32xf32>
    %199 = arith.addf %197, %198 : vector<8x32xf32>
    %200 = vector.broadcast %126 : vector<1x32xf32> to vector<8x32xf32>
    %201 = arith.addf %199, %200 : vector<8x32xf32>
    %cst_68 = arith.constant 0.000000e+00 : f32
    %202 = vector.broadcast %cst_68 : f32 to vector<8x32xf32>
    %203 = arith.maximumf %201, %202 : vector<8x32xf32>
    %c512 = arith.constant 512 : index
    %c0_69 = arith.constant 0 : index
    %204 = vector.load %arg2[%c512, %c0_69] : memref<640x32xbf16, #tpu.memory_space<vmem>>, vector<32x32xbf16>
    %c544 = arith.constant 544 : index
    %c0_70 = arith.constant 0 : index
    %205 = vector.load %arg2[%c544, %c0_70] : memref<640x32xbf16, #tpu.memory_space<vmem>>, vector<32x32xbf16>
    %206 = arith.truncf %203 : vector<8x32xf32> to vector<8x32xbf16>
    %207 = arith.extf %206 : vector<8x32xbf16> to vector<8x32xf32>
    %208 = arith.subf %203, %207 : vector<8x32xf32>
    %209 = arith.truncf %208 : vector<8x32xf32> to vector<8x32xbf16>
    %cst_71 = arith.constant dense<0.000000e+00> : vector<8x32xf32>
    %210 = tpu.matmul %206, %204, %cst_71 {dimension_numbers = #tpu.dot_dimension_numbers<[1], [0], [0], [1], [0, 0, 1, 1], [], []>} : vector<8x32xbf16>, vector<32x32xbf16>, vector<8x32xf32> -> vector<8x32xf32>
    %cst_72 = arith.constant dense<0.000000e+00> : vector<8x32xf32>
    %211 = tpu.matmul %209, %204, %cst_72 {dimension_numbers = #tpu.dot_dimension_numbers<[1], [0], [0], [1], [0, 0, 1, 1], [], []>} : vector<8x32xbf16>, vector<32x32xbf16>, vector<8x32xf32> -> vector<8x32xf32>
    %212 = arith.addf %210, %211 : vector<8x32xf32>
    %cst_73 = arith.constant dense<0.000000e+00> : vector<8x32xf32>
    %213 = tpu.matmul %206, %205, %cst_73 {dimension_numbers = #tpu.dot_dimension_numbers<[1], [0], [0], [1], [0, 0, 1, 1], [], []>} : vector<8x32xbf16>, vector<32x32xbf16>, vector<8x32xf32> -> vector<8x32xf32>
    %214 = arith.addf %212, %213 : vector<8x32xf32>
    %215 = vector.broadcast %127 : vector<1x32xf32> to vector<8x32xf32>
    %216 = arith.addf %214, %215 : vector<8x32xf32>
    %cst_74 = arith.constant 0.000000e+00 : f32
    %217 = vector.broadcast %cst_74 : f32 to vector<8x32xf32>
    %218 = arith.maximumf %216, %217 : vector<8x32xf32>
    %c576 = arith.constant 576 : index
    %c0_75 = arith.constant 0 : index
    %219 = vector.load %arg2[%c576, %c0_75] : memref<640x32xbf16, #tpu.memory_space<vmem>>, vector<32x32xbf16>
    %c608 = arith.constant 608 : index
    %c0_76 = arith.constant 0 : index
    %220 = vector.load %arg2[%c608, %c0_76] : memref<640x32xbf16, #tpu.memory_space<vmem>>, vector<32x32xbf16>
    %221 = arith.truncf %218 : vector<8x32xf32> to vector<8x32xbf16>
    %222 = arith.extf %221 : vector<8x32xbf16> to vector<8x32xf32>
    %223 = arith.subf %218, %222 : vector<8x32xf32>
    %224 = arith.truncf %223 : vector<8x32xf32> to vector<8x32xbf16>
    %cst_77 = arith.constant dense<0.000000e+00> : vector<8x32xf32>
    %225 = tpu.matmul %221, %219, %cst_77 {dimension_numbers = #tpu.dot_dimension_numbers<[1], [0], [0], [1], [0, 0, 1, 1], [], []>} : vector<8x32xbf16>, vector<32x32xbf16>, vector<8x32xf32> -> vector<8x32xf32>
    %cst_78 = arith.constant dense<0.000000e+00> : vector<8x32xf32>
    %226 = tpu.matmul %224, %219, %cst_78 {dimension_numbers = #tpu.dot_dimension_numbers<[1], [0], [0], [1], [0, 0, 1, 1], [], []>} : vector<8x32xbf16>, vector<32x32xbf16>, vector<8x32xf32> -> vector<8x32xf32>
    %227 = arith.addf %225, %226 : vector<8x32xf32>
    %cst_79 = arith.constant dense<0.000000e+00> : vector<8x32xf32>
    %228 = tpu.matmul %221, %220, %cst_79 {dimension_numbers = #tpu.dot_dimension_numbers<[1], [0], [0], [1], [0, 0, 1, 1], [], []>} : vector<8x32xbf16>, vector<32x32xbf16>, vector<8x32xf32> -> vector<8x32xf32>
    %229 = arith.addf %227, %228 : vector<8x32xf32>
    %230 = vector.broadcast %128 : vector<1x32xf32> to vector<8x32xf32>
    %231 = arith.addf %229, %230 : vector<8x32xf32>
    %232 = math.tanh %231 : vector<8x32xf32>
    %233 = vector.broadcast %123 : vector<1x32xf32> to vector<8x32xf32>
    %234 = arith.mulf %233, %232 : vector<8x32xf32>
    %c26_i32_80 = arith.constant 26 : i32
    %235 = tpu.dynamic_rotate %234 by %c26_i32_80 dim 1 : vector<8x32xf32>, i32 -> vector<8x32xf32>
    %236 = arith.mulf %235, %158 : vector<8x32xf32>
    %237 = arith.addf %158, %236 : vector<8x32xf32>
    %238 = arith.addf %237, %234 : vector<8x32xf32>
    %c0_81 = arith.constant 0 : index
    %c0_82 = arith.constant 0 : index
    %239 = vector.load %arg3[%c0_81, %c0_82] : memref<8x32xf32, #tpu.memory_space<vmem>>, vector<8x32xf32>
    tpu.vector_store %arg3[%c0_81, %c0_82], %238 {strides = array<i32>} : memref<8x32xf32, #tpu.memory_space<vmem>>, vector<8x32xf32>,
    return
  }
}

</mosaic_0001>

<llo_original>
// kernel: tpu_custom_call.1
$region0: #{tpu_custom_call.1}
  #allocation0 [shape = 'u32[]', space=smem, size = 0x4, offset = 0x4, fixed_abs, tag = 'smem constant byte address 0x4 - core index']
  #allocation1 [shape = 'u32[72,128]{1,0:T(1,128)}', space=vmem, size = 0x9000, scoped, tag = 'internal scratch']
  %s0 = inlined_call_operand.vmem [shape: f32[8,32], index: 0, kind: input, shape index: {}]
  %s1 = inlined_call_operand.vmem [shape: f32[16,32], index: 1, kind: input, shape index: {}]
  %s2 = inlined_call_operand.vmem [shape: bf16[640,32], index: 2, kind: input, shape index: {}]
  %s3 = inlined_call_operand.hbm [shape: f32[8,32], index: 3, kind: output, shape index: {}]
  %s4 = sld [smem:[#allocation0]]
  $region22: #{tpu_custom_call.1} parent=0
    _
  %s6 = ssub.s32 1, %s4
  %s7 = scalar_select 0, %s6, %s4
  $region1: #{tpu_custom_call.1} parent=0
    #allocation2 [shape = 'u8[4096]{0}', space=vmem, size = 0x1000, scoped, tag = 'output window, operand 0, single buffered']
    #allocation3 [shape = 's32[1]{0}', space=sflag, size = 0x4, scoped, tag = 'scoped memory for tpu_custom_call.1']
    %8 = vsyncpa [#allocation3], 0
    // Predicated region
    $region2: #{tpu_custom_call.1} parent=1 // pred_check
      _
    $region3: #{tpu_custom_call.1} parent=1 // pred_check_branch
      %10 = sbr.rel (0) target = $region5
    $region4: #{tpu_custom_call.1} parent=1 // pred_region
      _
    $region5: #{tpu_custom_call.1} parent=1 // pred_fallthru
      _
    // Predicated region
    $region6: #{tpu_custom_call.1} parent=1 // pred_check
      _
    $region7: #{tpu_custom_call.1} parent=1 // pred_check_branch
      %12 = sbr.rel (0) target = $region9
    $region8: #{tpu_custom_call.1} parent=1 // pred_region
      _
    $region9: #{tpu_custom_call.1} parent=1 // pred_fallthru
      _
    // Predicated region
    $region10: #{tpu_custom_call.1} parent=1 // pred_check
      _
    $region11: #{tpu_custom_call.1} parent=1 // pred_check_branch
      %14 = sbr.rel (0) target = $region13
    $region12: #{tpu_custom_call.1} parent=1 // pred_region
      _
    $region13: #{tpu_custom_call.1} parent=1 // pred_fallthru
      _
    %v16 = vld [vmem:[%s0] sm:$0xff]
    %v17 = vld [vmem:[%s1] sm:$0xff]
    %vm18 = vcmask 261120
    %v19 = vsel %vm18, %v16, 0.0
    %v20 = vrot.slane %v19, 4
    %v21 = vadd.f32 %v19, %v20
    %v22 = vrot.slane %v21, 2
    %v23 = vadd.f32 %v21, %v22
    %v24 = vrot.slane %v23, 1
    %v25 = vadd.f32 %v23, %v24
    %v26 = vrcp.pop 8.0
    %v27 = vmul.f32 8.0, %v26
    %v28 = vsub.f32 1.0, %v27
    %v29 = vmul.f32 %v26, %v28
    %v30 = vadd.f32 %v26, %v29
    %vm31 = vweird.f32 %v26
    %v32 = vsel %vm31, %v26, %v30
    %v33 = vmul.f32 %v25, %v32
    %v34 = vsub.f32 %v16, %v33
    %v35 = vmul.f32 %v34, %v34
    %v36 = vsel %vm18, %v35, 0.0
    %v37 = vrot.slane %v36, 4
    %v38 = vadd.f32 %v36, %v37
    %v39 = vrot.slane %v38, 2
    %v40 = vadd.f32 %v38, %v39
    %v41 = vrot.slane %v40, 1
    %v42 = vadd.f32 %v40, %v41
    %v43 = vmul.f32 %v42, %v32
    %v44 = vrsqrt.pop %v43
    %v45 = vmul.f32 %v44, %v43
    %v46 = vmul.f32 %v45, %v44
    %v47 = vmul.f32 0.5, %v46
    %v48 = vsub.f32 1.5, %v47
    %v49 = vmul.f32 %v44, %v48
    %v50 = vmul.f32 %v43, %v49
    %vm51 = vcmp.eq.f32.partialorder %v43, inf
    %v52 = vsel %vm51, %v43, %v50
    %vm53 = vcmp.eq.f32.partialorder %v43, 0.0
    %v54 = vand.u32 %v43, 2147483648
    %v55 = vsel %vm53, %v54, %v52
    %v56 = vadd.f32 %v55, 1e-06
    %v57 = vrcp.pop %v56
    %v58 = vmul.f32 %v56, %v57
    %v59 = vsub.f32 1.0, %v58
    %v60 = vmul.f32 %v57, %v59
    %v61 = vadd.f32 %v57, %v60
    %vm62 = vweird.f32 %v56
    %vm63 = vweird.f32 %v57
    %vm64 = vmor %vm62, %vm63
    %v65 = vsel %vm64, %v57, %v61
    %v66 = vand.u32 2147483647, %v56
    %vm67 = vcmp.eq.f32.partialorder %v66, 8.507059e+37
    %v68 = vand.u32 %v56, 2147483648
    %v69 = vor.u32 1.1754944e-38, %v68
    %v70 = vsel %vm67, %v69, %v65
    %v71 = vmul.f32 1.0, %v70
    %v72 = vlog2.pop %v71
    %v73 = vmul.f32 %v72, 0.6931472
    %v74 = vrcp.pop 3.0
    %v75 = vmul.f32 3.0, %v74
    %v76 = vsub.f32 1.0, %v75
    %v77 = vmul.f32 %v74, %v76
    %v78 = vadd.f32 %v74, %v77
    %vm79 = vweird.f32 %v74
    %v80 = vsel %vm79, %v74, %v78
    %v81 = vmul.f32 %v73, %v80
    %v82 = vadd.f32 %v17, %v81
    %v83 = vmax.f32 %v82, -5.0
    %v84 = vmin.f32 %v83, 5.0
    %v85 = vsub.f32 %v17, %v33
    %v86 = vperm.slane %v85, 0
    %v87 = vadd.f32 %v16, %v86
    %v88 = vmul.f32 %v84, 1.442695
    %v89 = vpow.pop %v88
    %v90 = vperm.slane %v89, 1
    %v91 = vmul.f32 %v87, %v90
    %v92 = vld [vmem:[%s2] sm:$0xf]
    %v93 = vld [vmem:[%s2 + $0x4] sm:$0xf]
    %v94 = vld [vmem:[%s2 + $0x8] sm:$0xf]
    %v95 = vld [vmem:[%s2 + $0xc] sm:$0xf]
    %v96 = vld [vmem:[%s2 + $0x10] sm:$0xf]
    %v97 = vld [vmem:[%s2 + $0x14] sm:$0xf]
    %v98 = vld [vmem:[%s2 + $0x18] sm:$0xf]
    %v99 = vld [vmem:[%s2 + $0x1c] sm:$0xf]
    %v100 = vpack.c.bf16 %v91, %v91
    %v101 = vunpack.c.l.bf16 %v100
    %v102 = vsub.f32 %v91, %v101
    %v103 = vpack.c.bf16 %v102, %v102
    %v108 = vunpack.c.l.b16 %v92
    %v109 = vunpack.c.l.b16 %v93
    %v110 = vunpack.c.l.b16 %v94
    %v111 = vunpack.c.l.b16 %v95
    %v112 = vpack.c.b16 %v109, %v108
    %v113 = vpack.c.b16 %v111, %v110
    %v117 = vsel %vm18, %v103, 0
    %119 = vmatpush.bf16.msra.mxu0 0
    %120 = vmatpush.bf16.msra.mxu0 0
    %121 = vmatpush.bf16.msra.mxu0 0
    %122 = vmatpush.bf16.msra.mxu0 0
    %123 = vmatpush.bf16.msra.mxu0 0
    %124 = vmatpush.bf16.msra.mxu0 0
    %125 = vmatpush.bf16.msra.mxu0 %v113
    %126 = vmatpush.bf16.msra.mxu0 %v112
    %127 = vmatmul.bf16.gmra.mxu0 %v117
    %v128 = vpop.f32.mrf.mxu0
    %v129 = vadd.f32 0.0, %v128
    %v130 = vpop.f32.mrf.mxu0
    %131 = vdwg.mxu0
    %v133 = vsel %vm18, %v100, 0
    %135 = vmatpush.bf16.msra.mxu0 0
    %136 = vmatpush.bf16.msra.mxu0 0
    %137 = vmatpush.bf16.msra.mxu0 0
    %138 = vmatpush.bf16.msra.mxu0 0
    %139 = vmatpush.bf16.msra.mxu0 0
    %140 = vmatpush.bf16.msra.mxu0 0
    %141 = vmatpush.bf16.msra.mxu0 %v113
    %142 = vmatpush.bf16.msra.mxu0 %v112
    %143 = vmatmul.bf16.gmra.mxu0 %v133
    %v144 = vpop.f32.mrf.mxu0
    %v145 = vadd.f32 %v129, %v144
    %v146 = vpop.f32.mrf.mxu0
    %147 = vdwg.mxu0
    %v152 = vunpack.c.l.b16 %v96
    %v153 = vunpack.c.l.b16 %v97
    %v154 = vunpack.c.l.b16 %v98
    %v155 = vunpack.c.l.b16 %v99
    %v156 = vpack.c.b16 %v153, %v152
    %v157 = vpack.c.b16 %v155, %v154
    %160 = vmatpush.bf16.msra.mxu0 0
    %161 = vmatpush.bf16.msra.mxu0 0
    %162 = vmatpush.bf16.msra.mxu0 0
    %163 = vmatpush.bf16.msra.mxu0 0
    %164 = vmatpush.bf16.msra.mxu0 0
    %165 = vmatpush.bf16.msra.mxu0 0
    %166 = vmatpush.bf16.msra.mxu0 %v157
    %167 = vmatpush.bf16.msra.mxu0 %v156
    %168 = vmatmul.bf16.gmra.mxu0 %v133
    %v169 = vpop.f32.mrf.mxu0
    %v170 = vadd.f32 0.0, %v169
    %v171 = vpop.f32.mrf.mxu0
    %172 = vdwg.mxu0
    %v173 = vadd.f32 %v145, %v170
    %v174 = vperm.slane %v17, 3
    %v175 = vadd.f32 %v173, %v174
    %v176 = vmax.f32 %v175, 0.0
    %v177 = vld [vmem:[%s2 + $0x20] sm:$0xf]
    %v178 = vld [vmem:[%s2 + $0x24] sm:$0xf]
    %v179 = vld [vmem:[%s2 + $0x28] sm:$0xf]
    %v180 = vld [vmem:[%s2 + $0x2c] sm:$0xf]
    %v181 = vld [vmem:[%s2 + $0x30] sm:$0xf]
    %v182 = vld [vmem:[%s2 + $0x34] sm:$0xf]
    %v183 = vld [vmem:[%s2 + $0x38] sm:$0xf]
    %v184 = vld [vmem:[%s2 + $0x3c] sm:$0xf]
    %v185 = vpack.c.bf16 %v176, %v176
    %v186 = vunpack.c.l.bf16 %v185
    %v187 = vsub.f32 %v176, %v186
    %v188 = vpack.c.bf16 %v187, %v187
    %v193 = vunpack.c.l.b16 %v177
    %v194 = vunpack.c.l.b16 %v178
    %v195 = vunpack.c.l.b16 %v179
    %v196 = vunpack.c.l.b16 %v180
    %v197 = vpack.c.b16 %v194, %v193
    %v198 = vpack.c.b16 %v196, %v195
    %v202 = vsel %vm18, %v188, 0
    %204 = vmatpush.bf16.msra.mxu0 0
    %205 = vmatpush.bf16.msra.mxu0 0
    %206 = vmatpush.bf16.msra.mxu0 0
    %207 = vmatpush.bf16.msra.mxu0 0
    %208 = vmatpush.bf16.msra.mxu0 0
    %209 = vmatpush.bf16.msra.mxu0 0
    %210 = vmatpush.bf16.msra.mxu0 %v198
    %211 = vmatpush.bf16.msra.mxu0 %v197
    %212 = vmatmul.bf16.gmra.mxu0 %v202
    %v213 = vpop.f32.mrf.mxu0
    %v214 = vadd.f32 0.0, %v213
    %v215 = vpop.f32.mrf.mxu0
    %216 = vdwg.mxu0
    %v218 = vsel %vm18, %v185, 0
    %220 = vmatpush.bf16.msra.mxu0 0
    %221 = vmatpush.bf16.msra.mxu0 0
    %222 = vmatpush.bf16.msra.mxu0 0
    %223 = vmatpush.bf16.msra.mxu0 0
    %224 = vmatpush.bf16.msra.mxu0 0
    %225 = vmatpush.bf16.msra.mxu0 0
    %226 = vmatpush.bf16.msra.mxu0 %v198
    %227 = vmatpush.bf16.msra.mxu0 %v197
    %228 = vmatmul.bf16.gmra.mxu0 %v218
    %v229 = vpop.f32.mrf.mxu0
    %v230 = vadd.f32 %v214, %v229
    %v231 = vpop.f32.mrf.mxu0
    %232 = vdwg.mxu0
    %v237 = vunpack.c.l.b16 %v181
    %v238 = vunpack.c.l.b16 %v182
    %v239 = vunpack.c.l.b16 %v183
    %v240 = vunpack.c.l.b16 %v184
    %v241 = vpack.c.b16 %v238, %v237
    %v242 = vpack.c.b16 %v240, %v239
    %245 = vmatpush.bf16.msra.mxu0 0
    %246 = vmatpush.bf16.msra.mxu0 0
    %247 = vmatpush.bf16.msra.mxu0 0
    %248 = vmatpush.bf16.msra.mxu0 0
    %249 = vmatpush.bf16.msra.mxu0 0
    %250 = vmatpush.bf16.msra.mxu0 0
    %251 = vmatpush.bf16.msra.mxu0 %v242
    %252 = vmatpush.bf16.msra.mxu0 %v241
    %253 = vmatmul.bf16.gmra.mxu0 %v218
    %v254 = vpop.f32.mrf.mxu0
    %v255 = vadd.f32 0.0, %v254
    %v256 = vpop.f32.mrf.mxu0
    %257 = vdwg.mxu0
    %v258 = vadd.f32 %v230, %v255
    %v259 = vperm.slane %v17, 4
    %v260 = vadd.f32 %v258, %v259
    %v261 = vmax.f32 %v260, 0.0
    %v262 = vld [vmem:[%s2 + $0x40] sm:$0xf]
    %v263 = vld [vmem:[%s2 + $0x44] sm:$0xf]
    %v264 = vld [vmem:[%s2 + $0x48] sm:$0xf]
    %v265 = vld [vmem:[%s2 + $0x4c] sm:$0xf]
    %v266 = vld [vmem:[%s2 + $0x50] sm:$0xf]
    %v267 = vld [vmem:[%s2 + $0x54] sm:$0xf]
    %v268 = vld [vmem:[%s2 + $0x58] sm:$0xf]
    %v269 = vld [vmem:[%s2 + $0x5c] sm:$0xf]
    %v270 = vpack.c.bf16 %v261, %v261
    %v271 = vunpack.c.l.bf16 %v270
    %v272 = vsub.f32 %v261, %v271
    %v273 = vpack.c.bf16 %v272, %v272
    %v278 = vunpack.c.l.b16 %v262
    %v279 = vunpack.c.l.b16 %v263
    %v280 = vunpack.c.l.b16 %v264
    %v281 = vunpack.c.l.b16 %v265
    %v282 = vpack.c.b16 %v279, %v278
    %v283 = vpack.c.b16 %v281, %v280
    %v287 = vsel %vm18, %v273, 0
    %289 = vmatpush.bf16.msra.mxu0 0
    %290 = vmatpush.bf16.msra.mxu0 0
    %291 = vmatpush.bf16.msra.mxu0 0
    %292 = vmatpush.bf16.msra.mxu0 0
    %293 = vmatpush.bf16.msra.mxu0 0
    %294 = vmatpush.bf16.msra.mxu0 0
    %295 = vmatpush.bf16.msra.mxu0 %v283
    %296 = vmatpush.bf16.msra.mxu0 %v282
    %297 = vmatmul.bf16.gmra.mxu0 %v287
    %v298 = vpop.f32.mrf.mxu0
    %v299 = vadd.f32 0.0, %v298
    %v300 = vpop.f32.mrf.mxu0
    %301 = vdwg.mxu0
    %v303 = vsel %vm18, %v270, 0
    %305 = vmatpush.bf16.msra.mxu0 0
    %306 = vmatpush.bf16.msra.mxu0 0
    %307 = vmatpush.bf16.msra.mxu0 0
    %308 = vmatpush.bf16.msra.mxu0 0
    %309 = vmatpush.bf16.msra.mxu0 0
    %310 = vmatpush.bf16.msra.mxu0 0
    %311 = vmatpush.bf16.msra.mxu0 %v283
    %312 = vmatpush.bf16.msra.mxu0 %v282
    %313 = vmatmul.bf16.gmra.mxu0 %v303
    %v314 = vpop.f32.mrf.mxu0
    %v315 = vadd.f32 %v299, %v314
    %v316 = vpop.f32.mrf.mxu0
    %317 = vdwg.mxu0
    %v322 = vunpack.c.l.b16 %v266
    %v323 = vunpack.c.l.b16 %v267
    %v324 = vunpack.c.l.b16 %v268
    %v325 = vunpack.c.l.b16 %v269
    %v326 = vpack.c.b16 %v323, %v322
    %v327 = vpack.c.b16 %v325, %v324
    %330 = vmatpush.bf16.msra.mxu0 0
    %331 = vmatpush.bf16.msra.mxu0 0
    %332 = vmatpush.bf16.msra.mxu0 0
    %333 = vmatpush.bf16.msra.mxu0 0
    %334 = vmatpush.bf16.msra.mxu0 0
    %335 = vmatpush.bf16.msra.mxu0 0
    %336 = vmatpush.bf16.msra.mxu0 %v327
    %337 = vmatpush.bf16.msra.mxu0 %v326
    %338 = vmatmul.bf16.gmra.mxu0 %v303
    %v339 = vpop.f32.mrf.mxu0
    %v340 = vadd.f32 0.0, %v339
    %v341 = vpop.f32.mrf.mxu0
    %342 = vdwg.mxu0
    %v343 = vadd.f32 %v315, %v340
    %v344 = vperm.slane %v17, 5
    %v345 = vadd.f32 %v343, %v344
    %v346 = vmax.f32 %v345, 0.0
    %v347 = vld [vmem:[%s2 + $0x60] sm:$0xf]
    %v348 = vld [vmem:[%s2 + $0x64] sm:$0xf]
    %v349 = vld [vmem:[%s2 + $0x68] sm:$0xf]
    %v350 = vld [vmem:[%s2 + $0x6c] sm:$0xf]
    %v351 = vld [vmem:[%s2 + $0x70] sm:$0xf]
    %v352 = vld [vmem:[%s2 + $0x74] sm:$0xf]
    %v353 = vld [vmem:[%s2 + $0x78] sm:$0xf]
    %v354 = vld [vmem:[%s2 + $0x7c] sm:$0xf]
    %v355 = vpack.c.bf16 %v346, %v346
    %v356 = vunpack.c.l.bf16 %v355
    %v357 = vsub.f32 %v346, %v356
    %v358 = vpack.c.bf16 %v357, %v357
    %v363 = vunpack.c.l.b16 %v347
    %v364 = vunpack.c.l.b16 %v348
    %v365 = vunpack.c.l.b16 %v349
    %v366 = vunpack.c.l.b16 %v350
    %v367 = vpack.c.b16 %v364, %v363
    %v368 = vpack.c.b16 %v366, %v365
    %v372 = vsel %vm18, %v358, 0
    %374 = vmatpush.bf16.msra.mxu0 0
    %375 = vmatpush.bf16.msra.mxu0 0
    %376 = vmatpush.bf16.msra.mxu0 0
    %377 = vmatpush.bf16.msra.mxu0 0
    %378 = vmatpush.bf16.msra.mxu0 0
    %379 = vmatpush.bf16.msra.mxu0 0
    %380 = vmatpush.bf16.msra.mxu0 %v368
    %381 = vmatpush.bf16.msra.mxu0 %v367
    %382 = vmatmul.bf16.gmra.mxu0 %v372
    %v383 = vpop.f32.mrf.mxu0
    %v384 = vadd.f32 0.0, %v383
    %v385 = vpop.f32.mrf.mxu0
    %386 = vdwg.mxu0
    %v388 = vsel %vm18, %v355, 0
    %390 = vmatpush.bf16.msra.mxu0 0
    %391 = vmatpush.bf16.msra.mxu0 0
    %392 = vmatpush.bf16.msra.mxu0 0
    %393 = vmatpush.bf16.msra.mxu0 0
    %394 = vmatpush.bf16.msra.mxu0 0
    %395 = vmatpush.bf16.msra.mxu0 0
    %396 = vmatpush.bf16.msra.mxu0 %v368
    %397 = vmatpush.bf16.msra.mxu0 %v367
    %398 = vmatmul.bf16.gmra.mxu0 %v388
    %v399 = vpop.f32.mrf.mxu0
    %v400 = vadd.f32 %v384, %v399
    %v401 = vpop.f32.mrf.mxu0
    %402 = vdwg.mxu0
    %v407 = vunpack.c.l.b16 %v351
    %v408 = vunpack.c.l.b16 %v352
    %v409 = vunpack.c.l.b16 %v353
    %v410 = vunpack.c.l.b16 %v354
    %v411 = vpack.c.b16 %v408, %v407
    %v412 = vpack.c.b16 %v410, %v409
    %415 = vmatpush.bf16.msra.mxu0 0
    %416 = vmatpush.bf16.msra.mxu0 0
    %417 = vmatpush.bf16.msra.mxu0 0
    %418 = vmatpush.bf16.msra.mxu0 0
    %419 = vmatpush.bf16.msra.mxu0 0
    %420 = vmatpush.bf16.msra.mxu0 0
    %421 = vmatpush.bf16.msra.mxu0 %v412
    %422 = vmatpush.bf16.msra.mxu0 %v411
    %423 = vmatmul.bf16.gmra.mxu0 %v388
    %v424 = vpop.f32.mrf.mxu0
    %v425 = vadd.f32 0.0, %v424
    %v426 = vpop.f32.mrf.mxu0
    %427 = vdwg.mxu0
    %v428 = vadd.f32 %v400, %v425
    %v429 = vperm.slane %v17, 6
    %v430 = vadd.f32 %v428, %v429
    %v431 = vmax.f32 %v430, 0.0
    %v432 = vld [vmem:[%s2 + $0x80] sm:$0xf]
    %v433 = vld [vmem:[%s2 + $0x84] sm:$0xf]
    %v434 = vld [vmem:[%s2 + $0x88] sm:$0xf]
    %v435 = vld [vmem:[%s2 + $0x8c] sm:$0xf]
    %v436 = vld [vmem:[%s2 + $0x90] sm:$0xf]
    %v437 = vld [vmem:[%s2 + $0x94] sm:$0xf]
    %v438 = vld [vmem:[%s2 + $0x98] sm:$0xf]
    %v439 = vld [vmem:[%s2 + $0x9c] sm:$0xf]
    %v440 = vpack.c.bf16 %v431, %v431
    %v441 = vunpack.c.l.bf16 %v440
    %v442 = vsub.f32 %v431, %v441
    %v443 = vpack.c.bf16 %v442, %v442
    %v448 = vunpack.c.l.b16 %v432
    %v449 = vunpack.c.l.b16 %v433
    %v450 = vunpack.c.l.b16 %v434
    %v451 = vunpack.c.l.b16 %v435
    %v452 = vpack.c.b16 %v449, %v448
    %v453 = vpack.c.b16 %v451, %v450
    %v457 = vsel %vm18, %v443, 0
    %459 = vmatpush.bf16.msra.mxu0 0
    %460 = vmatpush.bf16.msra.mxu0 0
    %461 = vmatpush.bf16.msra.mxu0 0
    %462 = vmatpush.bf16.msra.mxu0 0
    %463 = vmatpush.bf16.msra.mxu0 0
    %464 = vmatpush.bf16.msra.mxu0 0
    %465 = vmatpush.bf16.msra.mxu0 %v453
    %466 = vmatpush.bf16.msra.mxu0 %v452
    %467 = vmatmul.bf16.gmra.mxu0 %v457
    %v468 = vpop.f32.mrf.mxu0
    %v469 = vadd.f32 0.0, %v468
    %v470 = vpop.f32.mrf.mxu0
    %471 = vdwg.mxu0
    %v473 = vsel %vm18, %v440, 0
    %475 = vmatpush.bf16.msra.mxu0 0
    %476 = vmatpush.bf16.msra.mxu0 0
    %477 = vmatpush.bf16.msra.mxu0 0
    %478 = vmatpush.bf16.msra.mxu0 0
    %479 = vmatpush.bf16.msra.mxu0 0
    %480 = vmatpush.bf16.msra.mxu0 0
    %481 = vmatpush.bf16.msra.mxu0 %v453
    %482 = vmatpush.bf16.msra.mxu0 %v452
    %483 = vmatmul.bf16.gmra.mxu0 %v473
    %v484 = vpop.f32.mrf.mxu0
    %v485 = vadd.f32 %v469, %v484
    %v486 = vpop.f32.mrf.mxu0
    %487 = vdwg.mxu0
    %v492 = vunpack.c.l.b16 %v436
    %v493 = vunpack.c.l.b16 %v437
    %v494 = vunpack.c.l.b16 %v438
    %v495 = vunpack.c.l.b16 %v439
    %v496 = vpack.c.b16 %v493, %v492
    %v497 = vpack.c.b16 %v495, %v494
    %500 = vmatpush.bf16.msra.mxu0 0
    %501 = vmatpush.bf16.msra.mxu0 0
    %502 = vmatpush.bf16.msra.mxu0 0
    %503 = vmatpush.bf16.msra.mxu0 0
    %504 = vmatpush.bf16.msra.mxu0 0
    %505 = vmatpush.bf16.msra.mxu0 0
    %506 = vmatpush.bf16.msra.mxu0 %v497
    %507 = vmatpush.bf16.msra.mxu0 %v496
    %508 = vmatmul.bf16.gmra.mxu0 %v473
    %v509 = vpop.f32.mrf.mxu0
    %v510 = vadd.f32 0.0, %v509
    %v511 = vpop.f32.mrf.mxu0
    %512 = vdwg.mxu0
    %v513 = vadd.f32 %v485, %v510
    %v514 = vperm.slane %v17, 7
    %v515 = vadd.f32 %v513, %v514
    %v516 = vtanh.pop %v515
    %v517 = vperm.slane %v17, 2
    %v518 = vmul.f32 %v517, %v516
    %vm519 = vcmask 1047808
    %520 = vrot.lane.b32.xlu0 %v518, 32
    %v521 = vpop.permute.xlu0 %520
    %v522 = vsel %vm519, %v521, %v518
    %523 = vrot.lane.b32.xlu0 %v522, 32
    %v524 = vpop.permute.xlu0 %523
    %v525 = vsel %vm519, %v524, %v518
    %527 = vrot.lane.b32.xlu0 %v91, 6
    %v528 = vpop.permute.xlu0 %527
    %v530 = vmul.f32 %v525, %v528
    %532 = vrot.lane.b32.xlu0 %v530, 122
    %v533 = vpop.permute.xlu0 %532
    %v535 = vadd.f32 %v91, %v533
    %v536 = vadd.f32 %v535, %v518
    %v537 = vld [vmem:[%s1 + $0x8] sm:$0xff]
    %v538 = vsel %vm18, %v536, 0.0
    %v539 = vrot.slane %v538, 4
    %v540 = vadd.f32 %v538, %v539
    %v541 = vrot.slane %v540, 2
    %v542 = vadd.f32 %v540, %v541
    %v543 = vrot.slane %v542, 1
    %v544 = vadd.f32 %v542, %v543
    %v545 = vmul.f32 %v544, %v32
    %v546 = vsub.f32 %v536, %v545
    %v547 = vmul.f32 %v546, %v546
    %v548 = vsel %vm18, %v547, 0.0
    %v549 = vrot.slane %v548, 4
    %v550 = vadd.f32 %v548, %v549
    %v551 = vrot.slane %v550, 2
    %v552 = vadd.f32 %v550, %v551
    %v553 = vrot.slane %v552, 1
    %v554 = vadd.f32 %v552, %v553
    %v555 = vmul.f32 %v554, %v32
    %v556 = vrsqrt.pop %v555
    %v557 = vmul.f32 %v556, %v555
    %v558 = vmul.f32 %v557, %v556
    %v559 = vmul.f32 0.5, %v558
    %v560 = vsub.f32 1.5, %v559
    %v561 = vmul.f32 %v556, %v560
    %v562 = vmul.f32 %v555, %v561
    %vm563 = vcmp.eq.f32.partialorder %v555, inf
    %v564 = vsel %vm563, %v555, %v562
    %vm565 = vcmp.eq.f32.partialorder %v555, 0.0
    %v566 = vand.u32 %v555, 2147483648
    %v567 = vsel %vm565, %v566, %v564
    %v568 = vadd.f32 %v567, 1e-06
    %v569 = vrcp.pop %v568
    %v570 = vmul.f32 %v568, %v569
    %v571 = vsub.f32 1.0, %v570
    %v572 = vmul.f32 %v569, %v571
    %v573 = vadd.f32 %v569, %v572
    %vm574 = vweird.f32 %v568
    %vm575 = vweird.f32 %v569
    %vm576 = vmor %vm574, %vm575
    %v577 = vsel %vm576, %v569, %v573
    %v578 = vand.u32 2147483647, %v568
    %vm579 = vcmp.eq.f32.partialorder %v578, 8.507059e+37
    %v580 = vand.u32 %v568, 2147483648
    %v581 = vor.u32 1.1754944e-38, %v580
    %v582 = vsel %vm579, %v581, %v577
    %v583 = vmul.f32 1.0, %v582
    %v584 = vlog2.pop %v583
    %v585 = vmul.f32 %v584, 0.6931472
    %v586 = vmul.f32 %v585, %v80
    %v587 = vadd.f32 %v537, %v586
    %v588 = vmax.f32 %v587, -5.0
    %v589 = vmin.f32 %v588, 5.0
    %v590 = vsub.f32 %v537, %v545
    %v591 = vperm.slane %v590, 0
    %v592 = vadd.f32 %v536, %v591
    %v593 = vmul.f32 %v589, 1.442695
    %v594 = vpow.pop %v593
    %v595 = vperm.slane %v594, 1
    %v596 = vmul.f32 %v592, %v595
    %v597 = vld [vmem:[%s2 + $0xa0] sm:$0xf]
    %v598 = vld [vmem:[%s2 + $0xa4] sm:$0xf]
    %v599 = vld [vmem:[%s2 + $0xa8] sm:$0xf]
    %v600 = vld [vmem:[%s2 + $0xac] sm:$0xf]
    %v601 = vld [vmem:[%s2 + $0xb0] sm:$0xf]
    %v602 = vld [vmem:[%s2 + $0xb4] sm:$0xf]
    %v603 = vld [vmem:[%s2 + $0xb8] sm:$0xf]
    %v604 = vld [vmem:[%s2 + $0xbc] sm:$0xf]
    %v605 = vpack.c.bf16 %v596, %v596
    %v606 = vunpack.c.l.bf16 %v605
    %v607 = vsub.f32 %v596, %v606
    %v608 = vpack.c.bf16 %v607, %v607
    %v613 = vunpack.c.l.b16 %v597
    %v614 = vunpack.c.l.b16 %v598
    %v615 = vunpack.c.l.b16 %v599
    %v616 = vunpack.c.l.b16 %v600
    %v617 = vpack.c.b16 %v614, %v613
    %v618 = vpack.c.b16 %v616, %v615
    %v622 = vsel %vm18, %v608, 0
    %624 = vmatpush.bf16.msra.mxu0 0
    %625 = vmatpush.bf16.msra.mxu0 0
    %626 = vmatpush.bf16.msra.mxu0 0
    %627 = vmatpush.bf16.msra.mxu0 0
    %628 = vmatpush.bf16.msra.mxu0 0
    %629 = vmatpush.bf16.msra.mxu0 0
    %630 = vmatpush.bf16.msra.mxu0 %v618
    %631 = vmatpush.bf16.msra.mxu0 %v617
    %632 = vmatmul.bf16.gmra.mxu0 %v622
    %v633 = vpop.f32.mrf.mxu0
    %v634 = vadd.f32 0.0, %v633
    %v635 = vpop.f32.mrf.mxu0
    %636 = vdwg.mxu0
    %v638 = vsel %vm18, %v605, 0
    %640 = vmatpush.bf16.msra.mxu0 0
    %641 = vmatpush.bf16.msra.mxu0 0
    %642 = vmatpush.bf16.msra.mxu0 0
    %643 = vmatpush.bf16.msra.mxu0 0
    %644 = vmatpush.bf16.msra.mxu0 0
    %645 = vmatpush.bf16.msra.mxu0 0
    %646 = vmatpush.bf16.msra.mxu0 %v618
    %647 = vmatpush.bf16.msra.mxu0 %v617
    %648 = vmatmul.bf16.gmra.mxu0 %v638
    %v649 = vpop.f32.mrf.mxu0
    %v650 = vadd.f32 %v634, %v649
    %v651 = vpop.f32.mrf.mxu0
    %652 = vdwg.mxu0
    %v657 = vunpack.c.l.b16 %v601
    %v658 = vunpack.c.l.b16 %v602
    %v659 = vunpack.c.l.b16 %v603
    %v660 = vunpack.c.l.b16 %v604
    %v661 = vpack.c.b16 %v658, %v657
    %v662 = vpack.c.b16 %v660, %v659
    %665 = vmatpush.bf16.msra.mxu0 0
    %666 = vmatpush.bf16.msra.mxu0 0
    %667 = vmatpush.bf16.msra.mxu0 0
    %668 = vmatpush.bf16.msra.mxu0 0
    %669 = vmatpush.bf16.msra.mxu0 0
    %670 = vmatpush.bf16.msra.mxu0 0
    %671 = vmatpush.bf16.msra.mxu0 %v662
    %672 = vmatpush.bf16.msra.mxu0 %v661
    %673 = vmatmul.bf16.gmra.mxu0 %v638
    %v674 = vpop.f32.mrf.mxu0
    %v675 = vadd.f32 0.0, %v674
    %v676 = vpop.f32.mrf.mxu0
    %677 = vdwg.mxu0
    %v678 = vadd.f32 %v650, %v675
    %v679 = vperm.slane %v537, 3
    %v680 = vadd.f32 %v678, %v679
    %v681 = vmax.f32 %v680, 0.0
    %v682 = vld [vmem:[%s2 + $0xc0] sm:$0xf]
    %v683 = vld [vmem:[%s2 + $0xc4] sm:$0xf]
    %v684 = vld [vmem:[%s2 + $0xc8] sm:$0xf]
    %v685 = vld [vmem:[%s2 + $0xcc] sm:$0xf]
    %v686 = vld [vmem:[%s2 + $0xd0] sm:$0xf]
    %v687 = vld [vmem:[%s2 + $0xd4] sm:$0xf]
    %v688 = vld [vmem:[%s2 + $0xd8] sm:$0xf]
    %v689 = vld [vmem:[%s2 + $0xdc] sm:$0xf]
    %v690 = vpack.c.bf16 %v681, %v681
    %v691 = vunpack.c.l.bf16 %v690
    %v692 = vsub.f32 %v681, %v691
    %v693 = vpack.c.bf16 %v692, %v692
    %v698 = vunpack.c.l.b16 %v682
    %v699 = vunpack.c.l.b16 %v683
    %v700 = vunpack.c.l.b16 %v684
    %v701 = vunpack.c.l.b16 %v685
    %v702 = vpack.c.b16 %v699, %v698
    %v703 = vpack.c.b16 %v701, %v700
    %v707 = vsel %vm18, %v693, 0
    %709 = vmatpush.bf16.msra.mxu0 0
    %710 = vmatpush.bf16.msra.mxu0 0
    %711 = vmatpush.bf16.msra.mxu0 0
    %712 = vmatpush.bf16.msra.mxu0 0
    %713 = vmatpush.bf16.msra.mxu0 0
    %714 = vmatpush.bf16.msra.mxu0 0
    %715 = vmatpush.bf16.msra.mxu0 %v703
    %716 = vmatpush.bf16.msra.mxu0 %v702
    %717 = vmatmul.bf16.gmra.mxu0 %v707
    %v718 = vpop.f32.mrf.mxu0
    %v719 = vadd.f32 0.0, %v718
    %v720 = vpop.f32.mrf.mxu0
    %721 = vdwg.mxu0
    %v723 = vsel %vm18, %v690, 0
    %725 = vmatpush.bf16.msra.mxu0 0
    %726 = vmatpush.bf16.msra.mxu0 0
    %727 = vmatpush.bf16.msra.mxu0 0
    %728 = vmatpush.bf16.msra.mxu0 0
    %729 = vmatpush.bf16.msra.mxu0 0
    %730 = vmatpush.bf16.msra.mxu0 0
    %731 = vmatpush.bf16.msra.mxu0 %v703
    %732 = vmatpush.bf16.msra.mxu0 %v702
    %733 = vmatmul.bf16.gmra.mxu0 %v723
    %v734 = vpop.f32.mrf.mxu0
    %v735 = vadd.f32 %v719, %v734
    %v736 = vpop.f32.mrf.mxu0
    %737 = vdwg.mxu0
    %v742 = vunpack.c.l.b16 %v686
    %v743 = vunpack.c.l.b16 %v687
    %v744 = vunpack.c.l.b16 %v688
    %v745 = vunpack.c.l.b16 %v689
    %v746 = vpack.c.b16 %v743, %v742
    %v747 = vpack.c.b16 %v745, %v744
    %750 = vmatpush.bf16.msra.mxu0 0
    %751 = vmatpush.bf16.msra.mxu0 0
    %752 = vmatpush.bf16.msra.mxu0 0
    %753 = vmatpush.bf16.msra.mxu0 0
    %754 = vmatpush.bf16.msra.mxu0 0
    %755 = vmatpush.bf16.msra.mxu0 0
    %756 = vmatpush.bf16.msra.mxu0 %v747
    %757 = vmatpush.bf16.msra.mxu0 %v746
    %758 = vmatmul.bf16.gmra.mxu0 %v723
    %v759 = vpop.f32.mrf.mxu0
    %v760 = vadd.f32 0.0, %v759
    %v761 = vpop.f32.mrf.mxu0
    %762 = vdwg.mxu0
    %v763 = vadd.f32 %v735, %v760
    %v764 = vperm.slane %v537, 4
    %v765 = vadd.f32 %v763, %v764
    %v766 = vmax.f32 %v765, 0.0
    %v767 = vld [vmem:[%s2 + $0xe0] sm:$0xf]
    %v768 = vld [vmem:[%s2 + $0xe4] sm:$0xf]
    %v769 = vld [vmem:[%s2 + $0xe8] sm:$0xf]
    %v770 = vld [vmem:[%s2 + $0xec] sm:$0xf]
    %v771 = vld [vmem:[%s2 + $0xf0] sm:$0xf]
    %v772 = vld [vmem:[%s2 + $0xf4] sm:$0xf]
    %v773 = vld [vmem:[%s2 + $0xf8] sm:$0xf]
    %v774 = vld [vmem:[%s2 + $0xfc] sm:$0xf]
    %v775 = vpack.c.bf16 %v766, %v766
    %v776 = vunpack.c.l.bf16 %v775
    %v777 = vsub.f32 %v766, %v776
    %v778 = vpack.c.bf16 %v777, %v777
    %v783 = vunpack.c.l.b16 %v767
    %v784 = vunpack.c.l.b16 %v768
    %v785 = vunpack.c.l.b16 %v769
    %v786 = vunpack.c.l.b16 %v770
    %v787 = vpack.c.b16 %v784, %v783
    %v788 = vpack.c.b16 %v786, %v785
    %v792 = vsel %vm18, %v778, 0
    %794 = vmatpush.bf16.msra.mxu0 0
    %795 = vmatpush.bf16.msra.mxu0 0
    %796 = vmatpush.bf16.msra.mxu0 0
    %797 = vmatpush.bf16.msra.mxu0 0
    %798 = vmatpush.bf16.msra.mxu0 0
    %799 = vmatpush.bf16.msra.mxu0 0
    %800 = vmatpush.bf16.msra.mxu0 %v788
    %801 = vmatpush.bf16.msra.mxu0 %v787
    %802 = vmatmul.bf16.gmra.mxu0 %v792
    %v803 = vpop.f32.mrf.mxu0
    %v804 = vadd.f32 0.0, %v803
    %v805 = vpop.f32.mrf.mxu0
    %806 = vdwg.mxu0
    %v808 = vsel %vm18, %v775, 0
    %810 = vmatpush.bf16.msra.mxu0 0
    %811 = vmatpush.bf16.msra.mxu0 0
    %812 = vmatpush.bf16.msra.mxu0 0
    %813 = vmatpush.bf16.msra.mxu0 0
    %814 = vmatpush.bf16.msra.mxu0 0
    %815 = vmatpush.bf16.msra.mxu0 0
    %816 = vmatpush.bf16.msra.mxu0 %v788
    %817 = vmatpush.bf16.msra.mxu0 %v787
    %818 = vmatmul.bf16.gmra.mxu0 %v808
    %v819 = vpop.f32.mrf.mxu0
    %v820 = vadd.f32 %v804, %v819
    %v821 = vpop.f32.mrf.mxu0
    %822 = vdwg.mxu0
    %v827 = vunpack.c.l.b16 %v771
    %v828 = vunpack.c.l.b16 %v772
    %v829 = vunpack.c.l.b16 %v773
    %v830 = vunpack.c.l.b16 %v774
    %v831 = vpack.c.b16 %v828, %v827
    %v832 = vpack.c.b16 %v830, %v829
    %835 = vmatpush.bf16.msra.mxu0 0
    %836 = vmatpush.bf16.msra.mxu0 0
    %837 = vmatpush.bf16.msra.mxu0 0
    %838 = vmatpush.bf16.msra.mxu0 0
    %839 = vmatpush.bf16.msra.mxu0 0
    %840 = vmatpush.bf16.msra.mxu0 0
    %841 = vmatpush.bf16.msra.mxu0 %v832
    %842 = vmatpush.bf16.msra.mxu0 %v831
    %843 = vmatmul.bf16.gmra.mxu0 %v808
    %v844 = vpop.f32.mrf.mxu0
    %v845 = vadd.f32 0.0, %v844
    %v846 = vpop.f32.mrf.mxu0
    %847 = vdwg.mxu0
    %v848 = vadd.f32 %v820, %v845
    %v849 = vperm.slane %v537, 5
    %v850 = vadd.f32 %v848, %v849
    %v851 = vmax.f32 %v850, 0.0
    %v852 = vld [vmem:[%s2 + $0x100] sm:$0xf]
    %v853 = vld [vmem:[%s2 + $0x104] sm:$0xf]
    %v854 = vld [vmem:[%s2 + $0x108] sm:$0xf]
    %v855 = vld [vmem:[%s2 + $0x10c] sm:$0xf]
    %v856 = vld [vmem:[%s2 + $0x110] sm:$0xf]
    %v857 = vld [vmem:[%s2 + $0x114] sm:$0xf]
    %v858 = vld [vmem:[%s2 + $0x118] sm:$0xf]
    %v859 = vld [vmem:[%s2 + $0x11c] sm:$0xf]
    %v860 = vpack.c.bf16 %v851, %v851
    %v861 = vunpack.c.l.bf16 %v860
    %v862 = vsub.f32 %v851, %v861
    %v863 = vpack.c.bf16 %v862, %v862
    %v868 = vunpack.c.l.b16 %v852
    %v869 = vunpack.c.l.b16 %v853
    %v870 = vunpack.c.l.b16 %v854
    %v871 = vunpack.c.l.b16 %v855
    %v872 = vpack.c.b16 %v869, %v868
    %v873 = vpack.c.b16 %v871, %v870
    %v877 = vsel %vm18, %v863, 0
    %879 = vmatpush.bf16.msra.mxu0 0
    %880 = vmatpush.bf16.msra.mxu0 0
    %881 = vmatpush.bf16.msra.mxu0 0
    %882 = vmatpush.bf16.msra.mxu0 0
    %883 = vmatpush.bf16.msra.mxu0 0
    %884 = vmatpush.bf16.msra.mxu0 0
    %885 = vmatpush.bf16.msra.mxu0 %v873
    %886 = vmatpush.bf16.msra.mxu0 %v872
    %887 = vmatmul.bf16.gmra.mxu0 %v877
    %v888 = vpop.f32.mrf.mxu0
    %v889 = vadd.f32 0.0, %v888
    %v890 = vpop.f32.mrf.mxu0
    %891 = vdwg.mxu0
    %v893 = vsel %vm18, %v860, 0
    %895 = vmatpush.bf16.msra.mxu0 0
    %896 = vmatpush.bf16.msra.mxu0 0
    %897 = vmatpush.bf16.msra.mxu0 0
    %898 = vmatpush.bf16.msra.mxu0 0
    %899 = vmatpush.bf16.msra.mxu0 0
    %900 = vmatpush.bf16.msra.mxu0 0
    %901 = vmatpush.bf16.msra.mxu0 %v873
    %902 = vmatpush.bf16.msra.mxu0 %v872
    %903 = vmatmul.bf16.gmra.mxu0 %v893
    %v904 = vpop.f32.mrf.mxu0
    %v905 = vadd.f32 %v889, %v904
    %v906 = vpop.f32.mrf.mxu0
    %907 = vdwg.mxu0
    %v912 = vunpack.c.l.b16 %v856
    %v913 = vunpack.c.l.b16 %v857
    %v914 = vunpack.c.l.b16 %v858
    %v915 = vunpack.c.l.b16 %v859
    %v916 = vpack.c.b16 %v913, %v912
    %v917 = vpack.c.b16 %v915, %v914
    %920 = vmatpush.bf16.msra.mxu0 0
    %921 = vmatpush.bf16.msra.mxu0 0
    %922 = vmatpush.bf16.msra.mxu0 0
    %923 = vmatpush.bf16.msra.mxu0 0
    %924 = vmatpush.bf16.msra.mxu0 0
    %925 = vmatpush.bf16.msra.mxu0 0
    %926 = vmatpush.bf16.msra.mxu0 %v917
    %927 = vmatpush.bf16.msra.mxu0 %v916
    %928 = vmatmul.bf16.gmra.mxu0 %v893
    %v929 = vpop.f32.mrf.mxu0
    %v930 = vadd.f32 0.0, %v929
    %v931 = vpop.f32.mrf.mxu0
    %932 = vdwg.mxu0
    %v933 = vadd.f32 %v905, %v930
    %v934 = vperm.slane %v537, 6
    %v935 = vadd.f32 %v933, %v934
    %v936 = vmax.f32 %v935, 0.0
    %v937 = vld [vmem:[%s2 + $0x120] sm:$0xf]
    %v938 = vld [vmem:[%s2 + $0x124] sm:$0xf]
    %v939 = vld [vmem:[%s2 + $0x128] sm:$0xf]
    %v940 = vld [vmem:[%s2 + $0x12c] sm:$0xf]
    %v941 = vld [vmem:[%s2 + $0x130] sm:$0xf]
    %v942 = vld [vmem:[%s2 + $0x134] sm:$0xf]
    %v943 = vld [vmem:[%s2 + $0x138] sm:$0xf]
    %v944 = vld [vmem:[%s2 + $0x13c] sm:$0xf]
    %v945 = vpack.c.bf16 %v936, %v936
    %v946 = vunpack.c.l.bf16 %v945
    %v947 = vsub.f32 %v936, %v946
    %v948 = vpack.c.bf16 %v947, %v947
    %v953 = vunpack.c.l.b16 %v937
    %v954 = vunpack.c.l.b16 %v938
    %v955 = vunpack.c.l.b16 %v939
    %v956 = vunpack.c.l.b16 %v940
    %v957 = vpack.c.b16 %v954, %v953
    %v958 = vpack.c.b16 %v956, %v955
    %v962 = vsel %vm18, %v948, 0
    %964 = vmatpush.bf16.msra.mxu0 0
    %965 = vmatpush.bf16.msra.mxu0 0
    %966 = vmatpush.bf16.msra.mxu0 0
    %967 = vmatpush.bf16.msra.mxu0 0
    %968 = vmatpush.bf16.msra.mxu0 0
    %969 = vmatpush.bf16.msra.mxu0 0
    %970 = vmatpush.bf16.msra.mxu0 %v958
    %971 = vmatpush.bf16.msra.mxu0 %v957
    %972 = vmatmul.bf16.gmra.mxu0 %v962
    %v973 = vpop.f32.mrf.mxu0
    %v974 = vadd.f32 0.0, %v973
    %v975 = vpop.f32.mrf.mxu0
    %976 = vdwg.mxu0
    %v978 = vsel %vm18, %v945, 0
    %980 = vmatpush.bf16.msra.mxu0 0
    %981 = vmatpush.bf16.msra.mxu0 0
    %982 = vmatpush.bf16.msra.mxu0 0
    %983 = vmatpush.bf16.msra.mxu0 0
    %984 = vmatpush.bf16.msra.mxu0 0
    %985 = vmatpush.bf16.msra.mxu0 0
    %986 = vmatpush.bf16.msra.mxu0 %v958
    %987 = vmatpush.bf16.msra.mxu0 %v957
    %988 = vmatmul.bf16.gmra.mxu0 %v978
    %v989 = vpop.f32.mrf.mxu0
    %v990 = vadd.f32 %v974, %v989
    %v991 = vpop.f32.mrf.mxu0
    %992 = vdwg.mxu0
    %v997 = vunpack.c.l.b16 %v941
    %v998 = vunpack.c.l.b16 %v942
    %v999 = vunpack.c.l.b16 %v943
    %v1000 = vunpack.c.l.b16 %v944
    %v1001 = vpack.c.b16 %v998, %v997
    %v1002 = vpack.c.b16 %v1000, %v999
    %1005 = vmatpush.bf16.msra.mxu0 0
    %1006 = vmatpush.bf16.msra.mxu0 0
    %1007 = vmatpush.bf16.msra.mxu0 0
    %1008 = vmatpush.bf16.msra.mxu0 0
    %1009 = vmatpush.bf16.msra.mxu0 0
    %1010 = vmatpush.bf16.msra.mxu0 0
    %1011 = vmatpush.bf16.msra.mxu0 %v1002
    %1012 = vmatpush.bf16.msra.mxu0 %v1001
    %1013 = vmatmul.bf16.gmra.mxu0 %v978
    %v1014 = vpop.f32.mrf.mxu0
    %v1015 = vadd.f32 0.0, %v1014
    %v1016 = vpop.f32.mrf.mxu0
    %1017 = vdwg.mxu0
    %v1018 = vadd.f32 %v990, %v1015
    %v1019 = vperm.slane %v537, 7
    %v1020 = vadd.f32 %v1018, %v1019
    %v1021 = vtanh.pop %v1020
    %v1022 = vperm.slane %v537, 2
    %v1023 = vmul.f32 %v1022, %v1021
    %1024 = vrot.lane.b32.xlu0 %v1023, 32
    %v1025 = vpop.permute.xlu0 %1024
    %v1026 = vsel %vm519, %v1025, %v1023
    %1027 = vrot.lane.b32.xlu0 %v1026, 32
    %v1028 = vpop.permute.xlu0 %1027
    %v1029 = vsel %vm519, %v1028, %v1023
    %1031 = vrot.lane.b32.xlu0 %v596, 6
    %v1032 = vpop.permute.xlu0 %1031
    %v1034 = vmul.f32 %v1029, %v1032
    %1036 = vrot.lane.b32.xlu0 %v1034, 122
    %v1037 = vpop.permute.xlu0 %1036
    %v1039 = vadd.f32 %v596, %v1037
    %v1040 = vadd.f32 %v1039, %v1023
    %1041 = vst.msk [vmem:[#allocation2] sm:$0xff] %vm18, %v1040
    // Predicated region
    $region14: #{tpu_custom_call.1} parent=1 // pred_check
      _
    $region15: #{tpu_custom_call.1} parent=1 // pred_check_branch
      %1043 = sbr.rel (0) target = $region17
    $region16: #{tpu_custom_call.1} parent=1 // pred_region
      %1045 = vsyncadd [#allocation3], 0
      %s1047 = sshll.u32 [#allocation2], 4
      %s1048 = int_to_ptr.vmem [resolvable:$true] %s1047
      %s1049 = sshll.u32 %s3, 4
      %s1050 = int_to_ptr.hbm [resolvable:$true] %s1049
      %1052 = dma.vmem_to_hbm [thread:$0]  %s1048, 128, %s1050, [#allocation3]
    $region17: #{tpu_custom_call.1} parent=1 // pred_fallthru
      _
    // Predicated region
    $region18: #{tpu_custom_call.1} parent=1 // pred_check
      _
    $region19: #{tpu_custom_call.1} parent=1 // pred_check_branch
      %1054 = sbr.rel (0) target = $region21
    $region20: #{tpu_custom_call.1} parent=1 // pred_region
      %1056 = dma.done [#allocation3], 128
    $region21: #{tpu_custom_call.1} parent=1 // pred_fallthru
      _
    %1057 = vsyncpa [#allocation3], 1

</llo_original>
